<compile_context>
chip_gen: v5e
topology: v5e:2x2
jax: 0.10.0
libtpu: 0.0.40
codegen_flags: <defaults>
</compile_context>

<pallas_src>
import jax
import jax.numpy as jnp
from jax import lax
from jax.experimental import pallas as pl
from jax.experimental.pallas import tpu as pltpu


def homa_kernel(x_ref, wp_ref, w3_ref, w4c_ref, wf_ref, bf_ref, o_ref,
                xn_ref, prod_ref):
    # x_ref   : (Bt, C*N)   f32   batch rows on sublanes, channel-major spatial on lanes
    # wp_ref  : (P*N, 3R)   bf16  monomial projection (feat2 + E[xn^2] part of feat4), 1/N folded
    # w3_ref  : (C, 3R)     f32   rows [0 | rand_c*W3[:,c] | 0]           (feat3 residue)
    # w4c_ref : (C, 3R)     f32   rows [0 | 0 | W4[:,c]]                  (-3*E[xn]^2 residue)
    # wf_ref  : (3R, D)     f32   fuse Linear weight.T
    # bf_ref  : (1, D)      f32   fuse Linear bias
    # o_ref   : (Bt, D)
    # xn_ref  : (Bt, C*N)   f32   scratch: centered activations
    # prod_ref: (Bt, P*N)   bf16  scratch: degree-2 monomials (C squares + C*(C-1)/2 cross)
    C = w3_ref.shape[0]
    N = x_ref.shape[1] // C
    inv_n = 1.0 / N

    # ---- center each channel (f32); squares go straight into the monomial buffer ----
    s = []                                      # exact f32 residual sums  sum_n xn_c  -> (Bt, 1)
    for c in range(C):                          # C is small & static -> unrolled
        xc = x_ref[:, pl.ds(c * N, N)]
        mc = jnp.mean(xc, axis=-1, keepdims=True)
        xnc = xc - mc
        xn_ref[:, pl.ds(c * N, N)] = xnc
        prod_ref[:, pl.ds(c * N, N)] = (xnc * xnc).astype(prod_ref.dtype)
        s.append(jnp.sum(xnc, axis=-1, keepdims=True))

    # ---- cross products xn_i * xn_j (i < j); contiguous, 128-aligned lane slabs ----
    k = C
    for i in range(C):
        xi = xn_ref[:, pl.ds(i * N, N)]
        for j in range(i + 1, C):
            xj = xn_ref[:, pl.ds(j * N, N)]
            prod_ref[:, pl.ds(k * N, N)] = (xi * xj).astype(prod_ref.dtype)
            k += 1

    # ---- ONE well-shaped MXU matmul: all of feat2 (cov symmetry folded on the host)
    #      and the E[xn^2] part of feat4 land directly in the fused (Bt, 3R) buffer ----
    feats = jnp.dot(prod_ref[...], wp_ref[...], preferred_element_type=jnp.float32)

    # ---- tiny residual terms (analytically ~0, kept for exactness): feat3, -3*E[xn]^2 ----
    w3r = w3_ref[...]
    w4r = w4c_ref[...]
    for c in range(C):
        xm = s[c] * inv_n
        feats = feats + s[c] * w3r[c:c + 1, :] - (3.0 * xm * xm) * w4r[c:c + 1, :]

    # ---- LayerNorm over the physically fused 3R-wide feature (no affine, eps=1e-5) ----
    mu = jnp.mean(feats, axis=-1, keepdims=True)
    d = feats - mu
    var = jnp.mean(d * d, axis=-1, keepdims=True)
    norm = d * lax.rsqrt(var + 1e-5)

    # ---- fuse: single K=3R Linear + Mish.  tanh(softplus(x)) = u/(u+2), u = e^x*(e^x+2). ----
    pre = jnp.dot(norm, wf_ref[...], preferred_element_type=jnp.float32) + bf_ref[...]
    e = jnp.exp(jnp.minimum(pre, 20.0))          # clamp: for x > 20 the result is 1.0 in f32
    u = e * (e + 2.0)
    o_ref[...] = (pre * u * pl.reciprocal(u + 2.0, approx=True)).astype(o_ref.dtype)


def homa_forward(x, params, *, block_b=1024):
    B, C, H, W = x.shape
    N = H * W
    R = params["w3"].shape[0]
    D = params["wf"].shape[0]
    P = C + (C * (C - 1)) // 2                   # monomial channels: squares + upper-tri cross

    # ---- batch tiling: large tiles amortize per-step overhead; no padded copy of x ----
    if B <= block_b:
        bt = B                                   # single block == full array dim (always legal)
    else:
        bt = max(8, (block_b // 8) * 8)          # sublane-dense blocks (multiple of 8)
    grid = (pl.cdiv(B, bt),)                     # partial trailing block handled by Pallas

    x2 = x.reshape(B, C * N)                     # contiguous NCHW reshape: no data movement

    # ---- host-side weight packing (fused/hoisted by XLA under jit) ----
    f32 = jnp.float32
    w2 = params["w2"].astype(f32)                # (R, C*C)
    w3 = params["w3"].astype(f32)                # (R, C)
    w4 = params["w4"].astype(f32)                # (R, C)
    rand = params["rand"].astype(f32)            # (C,)

    # Monomial projection (P, 3R): diagonal rows = W2 diag / N (+ feat4 E[xn^2] columns),
    # off-diagonal rows pre-summed (cov symmetry) / N.  Repeated over N -> (P*N, 3R) bf16.
    wp_small = jnp.zeros((P, 3 * R), f32)
    diag_cols = [c * C + c for c in range(C)]
    wp_small = wp_small.at[0:C, 0:R].set(w2[:, diag_cols].T / N)
    wp_small = wp_small.at[0:C, 2 * R:3 * R].set(w4.T / N)
    off_rows = [(w2[:, i * C + j] + w2[:, j * C + i]) / N
                for i in range(C) for j in range(i + 1, C)]
    wp_small = wp_small.at[C:P, 0:R].set(jnp.stack(off_rows, axis=0))
    wp = jnp.repeat(wp_small, N, axis=0).astype(jnp.bfloat16)        # (P*N, 3R)

    w3rows = jnp.zeros((C, 3 * R), f32).at[:, R:2 * R].set(rand[:, None] * w3.T)
    w4rows = jnp.zeros((C, 3 * R), f32).at[:, 2 * R:3 * R].set(w4.T)
    wft = params["wf"].astype(f32).T                                  # (3R, D)
    bfr = params["bf"].astype(f32).reshape(1, D)

    # ---- per-TensorCore VMEM budget: raise the scoped default, stay under v7x physical ----
    est = (2 * bt * C * N * 4            # x double buffer (f32)
           + bt * C * N * 4              # xn scratch (f32)
           + bt * P * N * 2              # monomial scratch (bf16)
           + 2 * bt * D * 4              # out double buffer
           + 4 * bt * 3 * R * 4          # fused-feature temporaries
           + 2 * (P * N * 3 * R * 2 + 2 * C * 3 * R * 4 + 3 * R * D * 4 + D * 4))
    vmem_limit = int(min(64 * 1024 * 1024, max(32 * 1024 * 1024, 1.5 * est)))

    return pl.pallas_call(
        homa_kernel,
        out_shape=jax.ShapeDtypeStruct((B, D), jnp.float32),
        grid=grid,
        in_specs=[
            pl.BlockSpec((bt, C * N), lambda b: (b, 0)),
            pl.BlockSpec((P * N, 3 * R), lambda b: (0, 0)),
            pl.BlockSpec((C, 3 * R), lambda b: (0, 0)),
            pl.BlockSpec((C, 3 * R), lambda b: (0, 0)),
            pl.BlockSpec((3 * R, D), lambda b: (0, 0)),
            pl.BlockSpec((1, D), lambda b: (0, 0)),
        ],
        out_specs=pl.BlockSpec((bt, D), lambda b: (b, 0)),
        scratch_shapes=[
            pltpu.VMEM((bt, C * N), jnp.float32),
            pltpu.VMEM((bt, P * N), jnp.bfloat16),
        ],
        compiler_params=pltpu.CompilerParams(
            dimension_semantics=("parallel",),
            vmem_limit_bytes=vmem_limit,
        ),
    )(x2, wp, w3rows, w4rows, wft, bfr)


def init_params(key, C, rank, out_dim):
    """Deterministic synthetic parameters matching HOMABlock's shapes."""
    ks = jax.random.split(key, 6)
    s2 = 1.0 / jnp.sqrt(float(C * C))
    s1 = 1.0 / jnp.sqrt(float(C))
    sf = 1.0 / jnp.sqrt(float(3 * rank))
    w2 = jax.random.uniform(ks[0], (rank, C * C), jnp.float32, -s2, s2)
    w3 = jax.random.uniform(ks[1], (rank, C), jnp.float32, -s1, s1)
    w4 = jax.random.uniform(ks[2], (rank, C), jnp.float32, -s1, s1)
    wf = jax.random.uniform(ks[3], (out_dim, 3 * rank), jnp.float32, -sf, sf)
    bf = jax.random.uniform(ks[4], (out_dim,), jnp.float32, -sf, sf)
    rand = jax.random.normal(ks[5], (C,), jnp.float32)
    rand = rand / jnp.linalg.norm(rand)          # matches rand / rand.norm(p=2)
    return dict(w2=w2, w3=w3, w4=w4, wf=wf, bf=bf, rand=rand)


def homa_ref(x, params):
    """Plain-JAX reference mirroring the PyTorch forward (for validation)."""
    B, C, H, W = x.shape
    N = H * W
    xn = x - x.mean(axis=(-1, -2), keepdims=True)
    xf = xn.reshape(B, C, N)
    cov = jnp.einsum('bcn,bdn->bcd', xf, xf) / N
    f2 = cov.reshape(B, C * C) @ params["w2"].T
    m3 = (xn * params["rand"].reshape(1, C, 1, 1)).sum(axis=(-1, -2))
    f3 = m3 @ params["w3"].T
    xm = xn.mean(axis=(-1, -2))
    c4 = (xn ** 2).mean(axis=(-1, -2)) - 3.0 * xm ** 2
    f4 = c4 @ params["w4"].T
    fused = jnp.concatenate([f2, f3, f4], axis=-1)
    mu = fused.mean(axis=-1, keepdims=True)
    var = ((fused - mu) ** 2).mean(axis=-1, keepdims=True)
    fused = (fused - mu) / jnp.sqrt(var + 1e-5)
    pre = fused @ params["wf"].T + params["bf"]
    return pre * jnp.tanh(jax.nn.softplus(pre))


if __name__ == "__main__":
    B, C, H, W = 2, 4, 16, 16
    rank, out_dim = 64, 128

    key = jax.random.PRNGKey(0)
    kx, kp = jax.random.split(key)
    x = jax.random.normal(kx, (B, C, H, W), jnp.float32)
    params = init_params(kp, C, rank, out_dim)

    # jit the wrapper so the host-side weight packing is hoisted/fused.
    fwd = jax.jit(homa_forward)
    out = jax.block_until_ready(fwd(x, params))

    ref = homa_ref(x, params)
    assert out.shape == (B, out_dim)
    assert jnp.allclose(out, ref, atol=1e-2, rtol=1e-2), float(jnp.max(jnp.abs(out - ref)))
    print("KERNEL_OK")
</pallas_src>

<mosaic_0001>
module attributes {stable_mosaic.version = 11 : i64} {
  func.func @homa_kernel(%arg0: i32, %arg1: memref<2x1024xf32, #tpu.memory_space<vmem>>, %arg2: memref<2560x192xbf16, #tpu.memory_space<vmem>>, %arg3: memref<4x192xf32, #tpu.memory_space<vmem>>, %arg4: memref<4x192xf32, #tpu.memory_space<vmem>>, %arg5: memref<192x128xf32, #tpu.memory_space<vmem>>, %arg6: memref<1x128xf32, #tpu.memory_space<vmem>>, %arg7: memref<2x128xf32, #tpu.memory_space<vmem>>, %arg8: memref<2x1024xf32, #tpu.memory_space<vmem>>, %arg9: memref<2x2560xbf16, #tpu.memory_space<vmem>>) attributes {dimension_semantics = [#tpu.dimension_semantics<parallel>], iteration_bounds = array<i64: 1>, scalar_prefetch = 0 : i64, scratch_operands = 2 : i64, tpu.core_type = #tpu.core_type<tc>, window_params = [{transform_indices = @transform_0, window_bounds = array<i64: 2, 1024>}, {pipeline_mode = #tpu.pipeline_mode<synchronous>, transform_indices = @transform_1, window_bounds = array<i64: 2560, 192>}, {pipeline_mode = #tpu.pipeline_mode<synchronous>, transform_indices = @transform_2, window_bounds = array<i64: 4, 192>}, {pipeline_mode = #tpu.pipeline_mode<synchronous>, transform_indices = @transform_3, window_bounds = array<i64: 4, 192>}, {pipeline_mode = #tpu.pipeline_mode<synchronous>, transform_indices = @transform_4, window_bounds = array<i64: 192, 128>}, {pipeline_mode = #tpu.pipeline_mode<synchronous>, transform_indices = @transform_5, window_bounds = array<i64: 1, 128>}, {transform_indices = @transform_6, window_bounds = array<i64: 2, 128>}]} {
    %c0 = arith.constant 0 : index
    %c0_0 = arith.constant 0 : index
    %0 = vector.load %arg1[%c0, %c0_0] : memref<2x1024xf32, #tpu.memory_space<vmem>>, vector<2x256xf32>
    %cst = arith.constant dense<0.000000e+00> : vector<2xf32>
    %1 = vector.multi_reduction <add>, %0, %cst [1] : vector<2x256xf32> to vector<2xf32>
    %2 = vector.shape_cast %1 : vector<2xf32> to vector<2x1xf32>
    %cst_1 = arith.constant 2.560000e+02 : f32
    %3 = vector.broadcast %cst_1 : f32 to vector<2x1xf32>
    %4 = arith.divf %2, %3 : vector<2x1xf32>
    %5 = vector.broadcast %4 : vector<2x1xf32> to vector<2x256xf32>
    %6 = arith.subf %0, %5 : vector<2x256xf32>
    %c0_2 = arith.constant 0 : index
    %c0_3 = arith.constant 0 : index
    %7 = vector.load %arg8[%c0_2, %c0_3] : memref<2x1024xf32, #tpu.memory_space<vmem>>, vector<2x256xf32>
    tpu.vector_store %arg8[%c0_2, %c0_3], %6 {strides = array<i32>} : memref<2x1024xf32, #tpu.memory_space<vmem>>, vector<2x256xf32>,
    %8 = arith.mulf %6, %6 : vector<2x256xf32>
    %9 = arith.truncf %8 : vector<2x256xf32> to vector<2x256xbf16>
    %c0_4 = arith.constant 0 : index
    %c0_5 = arith.constant 0 : index
    %10 = vector.load %arg9[%c0_4, %c0_5] : memref<2x2560xbf16, #tpu.memory_space<vmem>>, vector<2x256xbf16>
    tpu.vector_store %arg9[%c0_4, %c0_5], %9 {strides = array<i32>} : memref<2x2560xbf16, #tpu.memory_space<vmem>>, vector<2x256xbf16>,
    %cst_6 = arith.constant dense<0.000000e+00> : vector<2xf32>
    %11 = vector.multi_reduction <add>, %6, %cst_6 [1] : vector<2x256xf32> to vector<2xf32>
    %12 = vector.shape_cast %11 : vector<2xf32> to vector<2x1xf32>
    %c0_7 = arith.constant 0 : index
    %c256 = arith.constant 256 : index
    %13 = vector.load %arg1[%c0_7, %c256] : memref<2x1024xf32, #tpu.memory_space<vmem>>, vector<2x256xf32>
    %cst_8 = arith.constant dense<0.000000e+00> : vector<2xf32>
    %14 = vector.multi_reduction <add>, %13, %cst_8 [1] : vector<2x256xf32> to vector<2xf32>
    %15 = vector.shape_cast %14 : vector<2xf32> to vector<2x1xf32>
    %cst_9 = arith.constant 2.560000e+02 : f32
    %16 = vector.broadcast %cst_9 : f32 to vector<2x1xf32>
    %17 = arith.divf %15, %16 : vector<2x1xf32>
    %18 = vector.broadcast %17 : vector<2x1xf32> to vector<2x256xf32>
    %19 = arith.subf %13, %18 : vector<2x256xf32>
    %c0_10 = arith.constant 0 : index
    %c256_11 = arith.constant 256 : index
    %20 = vector.load %arg8[%c0_10, %c256_11] : memref<2x1024xf32, #tpu.memory_space<vmem>>, vector<2x256xf32>
    tpu.vector_store %arg8[%c0_10, %c256_11], %19 {strides = array<i32>} : memref<2x1024xf32, #tpu.memory_space<vmem>>, vector<2x256xf32>,
    %21 = arith.mulf %19, %19 : vector<2x256xf32>
    %22 = arith.truncf %21 : vector<2x256xf32> to vector<2x256xbf16>
    %c0_12 = arith.constant 0 : index
    %c256_13 = arith.constant 256 : index
    %23 = vector.load %arg9[%c0_12, %c256_13] : memref<2x2560xbf16, #tpu.memory_space<vmem>>, vector<2x256xbf16>
    tpu.vector_store %arg9[%c0_12, %c256_13], %22 {strides = array<i32>} : memref<2x2560xbf16, #tpu.memory_space<vmem>>, vector<2x256xbf16>,
    %cst_14 = arith.constant dense<0.000000e+00> : vector<2xf32>
    %24 = vector.multi_reduction <add>, %19, %cst_14 [1] : vector<2x256xf32> to vector<2xf32>
    %25 = vector.shape_cast %24 : vector<2xf32> to vector<2x1xf32>
    %c0_15 = arith.constant 0 : index
    %c512 = arith.constant 512 : index
    %26 = vector.load %arg1[%c0_15, %c512] : memref<2x1024xf32, #tpu.memory_space<vmem>>, vector<2x256xf32>
    %cst_16 = arith.constant dense<0.000000e+00> : vector<2xf32>
    %27 = vector.multi_reduction <add>, %26, %cst_16 [1] : vector<2x256xf32> to vector<2xf32>
    %28 = vector.shape_cast %27 : vector<2xf32> to vector<2x1xf32>
    %cst_17 = arith.constant 2.560000e+02 : f32
    %29 = vector.broadcast %cst_17 : f32 to vector<2x1xf32>
    %30 = arith.divf %28, %29 : vector<2x1xf32>
    %31 = vector.broadcast %30 : vector<2x1xf32> to vector<2x256xf32>
    %32 = arith.subf %26, %31 : vector<2x256xf32>
    %c0_18 = arith.constant 0 : index
    %c512_19 = arith.constant 512 : index
    %33 = vector.load %arg8[%c0_18, %c512_19] : memref<2x1024xf32, #tpu.memory_space<vmem>>, vector<2x256xf32>
    tpu.vector_store %arg8[%c0_18, %c512_19], %32 {strides = array<i32>} : memref<2x1024xf32, #tpu.memory_space<vmem>>, vector<2x256xf32>,
    %34 = arith.mulf %32, %32 : vector<2x256xf32>
    %35 = arith.truncf %34 : vector<2x256xf32> to vector<2x256xbf16>
    %c0_20 = arith.constant 0 : index
    %c512_21 = arith.constant 512 : index
    %36 = vector.load %arg9[%c0_20, %c512_21] : memref<2x2560xbf16, #tpu.memory_space<vmem>>, vector<2x256xbf16>
    tpu.vector_store %arg9[%c0_20, %c512_21], %35 {strides = array<i32>} : memref<2x2560xbf16, #tpu.memory_space<vmem>>, vector<2x256xbf16>,
    %cst_22 = arith.constant dense<0.000000e+00> : vector<2xf32>
    %37 = vector.multi_reduction <add>, %32, %cst_22 [1] : vector<2x256xf32> to vector<2xf32>
    %38 = vector.shape_cast %37 : vector<2xf32> to vector<2x1xf32>
    %c0_23 = arith.constant 0 : index
    %c768 = arith.constant 768 : index
    %39 = vector.load %arg1[%c0_23, %c768] : memref<2x1024xf32, #tpu.memory_space<vmem>>, vector<2x256xf32>
    %cst_24 = arith.constant dense<0.000000e+00> : vector<2xf32>
    %40 = vector.multi_reduction <add>, %39, %cst_24 [1] : vector<2x256xf32> to vector<2xf32>
    %41 = vector.shape_cast %40 : vector<2xf32> to vector<2x1xf32>
    %cst_25 = arith.constant 2.560000e+02 : f32
    %42 = vector.broadcast %cst_25 : f32 to vector<2x1xf32>
    %43 = arith.divf %41, %42 : vector<2x1xf32>
    %44 = vector.broadcast %43 : vector<2x1xf32> to vector<2x256xf32>
    %45 = arith.subf %39, %44 : vector<2x256xf32>
    %c0_26 = arith.constant 0 : index
    %c768_27 = arith.constant 768 : index
    %46 = vector.load %arg8[%c0_26, %c768_27] : memref<2x1024xf32, #tpu.memory_space<vmem>>, vector<2x256xf32>
    tpu.vector_store %arg8[%c0_26, %c768_27], %45 {strides = array<i32>} : memref<2x1024xf32, #tpu.memory_space<vmem>>, vector<2x256xf32>,
    %47 = arith.mulf %45, %45 : vector<2x256xf32>
    %48 = arith.truncf %47 : vector<2x256xf32> to vector<2x256xbf16>
    %c0_28 = arith.constant 0 : index
    %c768_29 = arith.constant 768 : index
    %49 = vector.load %arg9[%c0_28, %c768_29] : memref<2x2560xbf16, #tpu.memory_space<vmem>>, vector<2x256xbf16>
    tpu.vector_store %arg9[%c0_28, %c768_29], %48 {strides = array<i32>} : memref<2x2560xbf16, #tpu.memory_space<vmem>>, vector<2x256xbf16>,
    %cst_30 = arith.constant dense<0.000000e+00> : vector<2xf32>
    %50 = vector.multi_reduction <add>, %45, %cst_30 [1] : vector<2x256xf32> to vector<2xf32>
    %51 = vector.shape_cast %50 : vector<2xf32> to vector<2x1xf32>
    %c0_31 = arith.constant 0 : index
    %c0_32 = arith.constant 0 : index
    %52 = vector.load %arg8[%c0_31, %c0_32] : memref<2x1024xf32, #tpu.memory_space<vmem>>, vector<2x256xf32>
    %c0_33 = arith.constant 0 : index
    %c256_34 = arith.constant 256 : index
    %53 = vector.load %arg8[%c0_33, %c256_34] : memref<2x1024xf32, #tpu.memory_space<vmem>>, vector<2x256xf32>
    %54 = arith.mulf %52, %53 : vector<2x256xf32>
    %55 = arith.truncf %54 : vector<2x256xf32> to vector<2x256xbf16>
    %c0_35 = arith.constant 0 : index
    %c1024 = arith.constant 1024 : index
    %56 = vector.load %arg9[%c0_35, %c1024] : memref<2x2560xbf16, #tpu.memory_space<vmem>>, vector<2x256xbf16>
    tpu.vector_store %arg9[%c0_35, %c1024], %55 {strides = array<i32>} : memref<2x2560xbf16, #tpu.memory_space<vmem>>, vector<2x256xbf16>,
    %c0_36 = arith.constant 0 : index
    %c512_37 = arith.constant 512 : index
    %57 = vector.load %arg8[%c0_36, %c512_37] : memref<2x1024xf32, #tpu.memory_space<vmem>>, vector<2x256xf32>
    %58 = arith.mulf %52, %57 : vector<2x256xf32>
    %59 = arith.truncf %58 : vector<2x256xf32> to vector<2x256xbf16>
    %c0_38 = arith.constant 0 : index
    %c1280 = arith.constant 1280 : index
    %60 = vector.load %arg9[%c0_38, %c1280] : memref<2x2560xbf16, #tpu.memory_space<vmem>>, vector<2x256xbf16>
    tpu.vector_store %arg9[%c0_38, %c1280], %59 {strides = array<i32>} : memref<2x2560xbf16, #tpu.memory_space<vmem>>, vector<2x256xbf16>,
    %c0_39 = arith.constant 0 : index
    %c768_40 = arith.constant 768 : index
    %61 = vector.load %arg8[%c0_39, %c768_40] : memref<2x1024xf32, #tpu.memory_space<vmem>>, vector<2x256xf32>
    %62 = arith.mulf %52, %61 : vector<2x256xf32>
    %63 = arith.truncf %62 : vector<2x256xf32> to vector<2x256xbf16>
    %c0_41 = arith.constant 0 : index
    %c1536 = arith.constant 1536 : index
    %64 = vector.load %arg9[%c0_41, %c1536] : memref<2x2560xbf16, #tpu.memory_space<vmem>>, vector<2x256xbf16>
    tpu.vector_store %arg9[%c0_41, %c1536], %63 {strides = array<i32>} : memref<2x2560xbf16, #tpu.memory_space<vmem>>, vector<2x256xbf16>,
    %c0_42 = arith.constant 0 : index
    %c256_43 = arith.constant 256 : index
    %65 = vector.load %arg8[%c0_42, %c256_43] : memref<2x1024xf32, #tpu.memory_space<vmem>>, vector<2x256xf32>
    %c0_44 = arith.constant 0 : index
    %c512_45 = arith.constant 512 : index
    %66 = vector.load %arg8[%c0_44, %c512_45] : memref<2x1024xf32, #tpu.memory_space<vmem>>, vector<2x256xf32>
    %67 = arith.mulf %65, %66 : vector<2x256xf32>
    %68 = arith.truncf %67 : vector<2x256xf32> to vector<2x256xbf16>
    %c0_46 = arith.constant 0 : index
    %c1792 = arith.constant 1792 : index
    %69 = vector.load %arg9[%c0_46, %c1792] : memref<2x2560xbf16, #tpu.memory_space<vmem>>, vector<2x256xbf16>
    tpu.vector_store %arg9[%c0_46, %c1792], %68 {strides = array<i32>} : memref<2x2560xbf16, #tpu.memory_space<vmem>>, vector<2x256xbf16>,
    %c0_47 = arith.constant 0 : index
    %c768_48 = arith.constant 768 : index
    %70 = vector.load %arg8[%c0_47, %c768_48] : memref<2x1024xf32, #tpu.memory_space<vmem>>, vector<2x256xf32>
    %71 = arith.mulf %65, %70 : vector<2x256xf32>
    %72 = arith.truncf %71 : vector<2x256xf32> to vector<2x256xbf16>
    %c0_49 = arith.constant 0 : index
    %c2048 = arith.constant 2048 : index
    %73 = vector.load %arg9[%c0_49, %c2048] : memref<2x2560xbf16, #tpu.memory_space<vmem>>, vector<2x256xbf16>
    tpu.vector_store %arg9[%c0_49, %c2048], %72 {strides = array<i32>} : memref<2x2560xbf16, #tpu.memory_space<vmem>>, vector<2x256xbf16>,
    %c0_50 = arith.constant 0 : index
    %c512_51 = arith.constant 512 : index
    %74 = vector.load %arg8[%c0_50, %c512_51] : memref<2x1024xf32, #tpu.memory_space<vmem>>, vector<2x256xf32>
    %c0_52 = arith.constant 0 : index
    %c768_53 = arith.constant 768 : index
    %75 = vector.load %arg8[%c0_52, %c768_53] : memref<2x1024xf32, #tpu.memory_space<vmem>>, vector<2x256xf32>
    %76 = arith.mulf %74, %75 : vector<2x256xf32>
    %77 = arith.truncf %76 : vector<2x256xf32> to vector<2x256xbf16>
    %c0_54 = arith.constant 0 : index
    %c2304 = arith.constant 2304 : index
    %78 = vector.load %arg9[%c0_54, %c2304] : memref<2x2560xbf16, #tpu.memory_space<vmem>>, vector<2x256xbf16>
    tpu.vector_store %arg9[%c0_54, %c2304], %77 {strides = array<i32>} : memref<2x2560xbf16, #tpu.memory_space<vmem>>, vector<2x256xbf16>,
    %c0_55 = arith.constant 0 : index
    %c0_56 = arith.constant 0 : index
    %79 = vector.load %arg9[%c0_55, %c0_56] : memref<2x2560xbf16, #tpu.memory_space<vmem>>, vector<2x2560xbf16>
    %c0_57 = arith.constant 0 : index
    %c0_58 = arith.constant 0 : index
    %80 = vector.load %arg2[%c0_57, %c0_58] : memref<2560x192xbf16, #tpu.memory_space<vmem>>, vector<2560x192xbf16>
    %cst_59 = arith.constant dense<0.000000e+00> : vector<2x192xf32>
    %81 = tpu.matmul %79, %80, %cst_59 {dimension_numbers = #tpu.dot_dimension_numbers<[1], [0], [0], [1], [0, 0, 1, 1], [], []>} : vector<2x2560xbf16>, vector<2560x192xbf16>, vector<2x192xf32> -> vector<2x192xf32>
    %c0_60 = arith.constant 0 : index
    %c0_61 = arith.constant 0 : index
    %82 = vector.load %arg3[%c0_60, %c0_61] : memref<4x192xf32, #tpu.memory_space<vmem>>, vector<4x192xf32>
    %c0_62 = arith.constant 0 : index
    %c0_63 = arith.constant 0 : index
    %83 = vector.load %arg4[%c0_62, %c0_63] : memref<4x192xf32, #tpu.memory_space<vmem>>, vector<4x192xf32>
    %cst_64 = arith.constant 3.906250e-03 : f32
    %84 = vector.broadcast %cst_64 : f32 to vector<2x1xf32>
    %85 = arith.mulf %12, %84 : vector<2x1xf32>
    %86 = vector.extract_strided_slice %82 {offsets = [0, 0], sizes = [1, 192], strides = [1, 1]} : vector<4x192xf32> to vector<1x192xf32>
    %87 = vector.broadcast %12 : vector<2x1xf32> to vector<2x192xf32>
    %88 = vector.broadcast %86 : vector<1x192xf32> to vector<2x192xf32>
    %89 = arith.mulf %87, %88 : vector<2x192xf32>
    %90 = arith.addf %81, %89 : vector<2x192xf32>
    %cst_65 = arith.constant 3.000000e+00 : f32
    %91 = vector.broadcast %cst_65 : f32 to vector<2x1xf32>
    %92 = arith.mulf %91, %85 : vector<2x1xf32>
    %93 = arith.mulf %92, %85 : vector<2x1xf32>
    %94 = vector.extract_strided_slice %83 {offsets = [0, 0], sizes = [1, 192], strides = [1, 1]} : vector<4x192xf32> to vector<1x192xf32>
    %95 = vector.broadcast %93 : vector<2x1xf32> to vector<2x192xf32>
    %96 = vector.broadcast %94 : vector<1x192xf32> to vector<2x192xf32>
    %97 = arith.mulf %95, %96 : vector<2x192xf32>
    %98 = arith.subf %90, %97 : vector<2x192xf32>
    %cst_66 = arith.constant 3.906250e-03 : f32
    %99 = vector.broadcast %cst_66 : f32 to vector<2x1xf32>
    %100 = arith.mulf %25, %99 : vector<2x1xf32>
    %101 = vector.extract_strided_slice %82 {offsets = [1, 0], sizes = [1, 192], strides = [1, 1]} : vector<4x192xf32> to vector<1x192xf32>
    %102 = vector.broadcast %25 : vector<2x1xf32> to vector<2x192xf32>
    %103 = vector.broadcast %101 : vector<1x192xf32> to vector<2x192xf32>
    %104 = arith.mulf %102, %103 : vector<2x192xf32>
    %105 = arith.addf %98, %104 : vector<2x192xf32>
    %cst_67 = arith.constant 3.000000e+00 : f32
    %106 = vector.broadcast %cst_67 : f32 to vector<2x1xf32>
    %107 = arith.mulf %106, %100 : vector<2x1xf32>
    %108 = arith.mulf %107, %100 : vector<2x1xf32>
    %109 = vector.extract_strided_slice %83 {offsets = [1, 0], sizes = [1, 192], strides = [1, 1]} : vector<4x192xf32> to vector<1x192xf32>
    %110 = vector.broadcast %108 : vector<2x1xf32> to vector<2x192xf32>
    %111 = vector.broadcast %109 : vector<1x192xf32> to vector<2x192xf32>
    %112 = arith.mulf %110, %111 : vector<2x192xf32>
    %113 = arith.subf %105, %112 : vector<2x192xf32>
    %cst_68 = arith.constant 3.906250e-03 : f32
    %114 = vector.broadcast %cst_68 : f32 to vector<2x1xf32>
    %115 = arith.mulf %38, %114 : vector<2x1xf32>
    %116 = vector.extract_strided_slice %82 {offsets = [2, 0], sizes = [1, 192], strides = [1, 1]} : vector<4x192xf32> to vector<1x192xf32>
    %117 = vector.broadcast %38 : vector<2x1xf32> to vector<2x192xf32>
    %118 = vector.broadcast %116 : vector<1x192xf32> to vector<2x192xf32>
    %119 = arith.mulf %117, %118 : vector<2x192xf32>
    %120 = arith.addf %113, %119 : vector<2x192xf32>
    %cst_69 = arith.constant 3.000000e+00 : f32
    %121 = vector.broadcast %cst_69 : f32 to vector<2x1xf32>
    %122 = arith.mulf %121, %115 : vector<2x1xf32>
    %123 = arith.mulf %122, %115 : vector<2x1xf32>
    %124 = vector.extract_strided_slice %83 {offsets = [2, 0], sizes = [1, 192], strides = [1, 1]} : vector<4x192xf32> to vector<1x192xf32>
    %125 = vector.broadcast %123 : vector<2x1xf32> to vector<2x192xf32>
    %126 = vector.broadcast %124 : vector<1x192xf32> to vector<2x192xf32>
    %127 = arith.mulf %125, %126 : vector<2x192xf32>
    %128 = arith.subf %120, %127 : vector<2x192xf32>
    %cst_70 = arith.constant 3.906250e-03 : f32
    %129 = vector.broadcast %cst_70 : f32 to vector<2x1xf32>
    %130 = arith.mulf %51, %129 : vector<2x1xf32>
    %131 = vector.extract_strided_slice %82 {offsets = [3, 0], sizes = [1, 192], strides = [1, 1]} : vector<4x192xf32> to vector<1x192xf32>
    %132 = vector.broadcast %51 : vector<2x1xf32> to vector<2x192xf32>
    %133 = vector.broadcast %131 : vector<1x192xf32> to vector<2x192xf32>
    %134 = arith.mulf %132, %133 : vector<2x192xf32>
    %135 = arith.addf %128, %134 : vector<2x192xf32>
    %cst_71 = arith.constant 3.000000e+00 : f32
    %136 = vector.broadcast %cst_71 : f32 to vector<2x1xf32>
    %137 = arith.mulf %136, %130 : vector<2x1xf32>
    %138 = arith.mulf %137, %130 : vector<2x1xf32>
    %139 = vector.extract_strided_slice %83 {offsets = [3, 0], sizes = [1, 192], strides = [1, 1]} : vector<4x192xf32> to vector<1x192xf32>
    %140 = vector.broadcast %138 : vector<2x1xf32> to vector<2x192xf32>
    %141 = vector.broadcast %139 : vector<1x192xf32> to vector<2x192xf32>
    %142 = arith.mulf %140, %141 : vector<2x192xf32>
    %143 = arith.subf %135, %142 : vector<2x192xf32>
    %cst_72 = arith.constant dense<0.000000e+00> : vector<2xf32>
    %144 = vector.multi_reduction <add>, %143, %cst_72 [1] : vector<2x192xf32> to vector<2xf32>
    %145 = vector.shape_cast %144 : vector<2xf32> to vector<2x1xf32>
    %cst_73 = arith.constant 1.920000e+02 : f32
    %146 = vector.broadcast %cst_73 : f32 to vector<2x1xf32>
    %147 = arith.divf %145, %146 : vector<2x1xf32>
    %148 = vector.broadcast %147 : vector<2x1xf32> to vector<2x192xf32>
    %149 = arith.subf %143, %148 : vector<2x192xf32>
    %150 = arith.mulf %149, %149 : vector<2x192xf32>
    %cst_74 = arith.constant dense<0.000000e+00> : vector<2xf32>
    %151 = vector.multi_reduction <add>, %150, %cst_74 [1] : vector<2x192xf32> to vector<2xf32>
    %152 = vector.shape_cast %151 : vector<2xf32> to vector<2x1xf32>
    %cst_75 = arith.constant 1.920000e+02 : f32
    %153 = vector.broadcast %cst_75 : f32 to vector<2x1xf32>
    %154 = arith.divf %152, %153 : vector<2x1xf32>
    %cst_76 = arith.constant 9.99999974E-6 : f32
    %155 = vector.broadcast %cst_76 : f32 to vector<2x1xf32>
    %156 = arith.addf %154, %155 : vector<2x1xf32>
    %157 = math.rsqrt %156 : vector<2x1xf32>
    %158 = vector.broadcast %157 : vector<2x1xf32> to vector<2x192xf32>
    %159 = arith.mulf %149, %158 : vector<2x192xf32>
    %c0_77 = arith.constant 0 : index
    %c0_78 = arith.constant 0 : index
    %160 = vector.load %arg5[%c0_77, %c0_78] : memref<192x128xf32, #tpu.memory_space<vmem>>, vector<192x128xf32>
    %cst_79 = arith.constant dense<0.000000e+00> : vector<2x128xf32>
    %161 = tpu.matmul %159, %160, %cst_79 {dimension_numbers = #tpu.dot_dimension_numbers<[1], [0], [0], [1], [0, 0, 1, 1], [], []>} : vector<2x192xf32>, vector<192x128xf32>, vector<2x128xf32> -> vector<2x128xf32>
    %c0_80 = arith.constant 0 : index
    %c0_81 = arith.constant 0 : index
    %162 = vector.load %arg6[%c0_80, %c0_81] : memref<1x128xf32, #tpu.memory_space<vmem>>, vector<1x128xf32>
    %163 = vector.broadcast %162 : vector<1x128xf32> to vector<2x128xf32>
    %164 = arith.addf %161, %163 : vector<2x128xf32>
    %cst_82 = arith.constant 2.000000e+01 : f32
    %165 = vector.broadcast %cst_82 : f32 to vector<2x128xf32>
    %166 = arith.minimumf %164, %165 : vector<2x128xf32>
    %167 = math.exp %166 : vector<2x128xf32>
    %cst_83 = arith.constant 2.000000e+00 : f32
    %168 = vector.broadcast %cst_83 : f32 to vector<2x128xf32>
    %169 = arith.addf %167, %168 : vector<2x128xf32>
    %170 = arith.mulf %167, %169 : vector<2x128xf32>
    %171 = arith.mulf %164, %170 : vector<2x128xf32>
    %cst_84 = arith.constant 2.000000e+00 : f32
    %172 = vector.broadcast %cst_84 : f32 to vector<2x128xf32>
    %173 = arith.addf %170, %172 : vector<2x128xf32>
    %174 = tpu.reciprocal %173 {approx = true} : vector<2x128xf32> -> vector<2x128xf32>
    %175 = arith.mulf %171, %174 : vector<2x128xf32>
    %c0_85 = arith.constant 0 : index
    %c0_86 = arith.constant 0 : index
    %176 = vector.load %arg7[%c0_85, %c0_86] : memref<2x128xf32, #tpu.memory_space<vmem>>, vector<2x128xf32>
    tpu.vector_store %arg7[%c0_85, %c0_86], %175 {strides = array<i32>} : memref<2x128xf32, #tpu.memory_space<vmem>>, vector<2x128xf32>,
    return
  }
  func.func @transform_0(%arg0: i32) -> (i32, i32) {
    %c0_i32 = arith.constant 0 : i32
    %c0_i32_0 = arith.constant 0 : i32
    return %arg0, %c0_i32 : i32, i32
  }
  func.func @transform_1(%arg0: i32) -> (i32, i32) {
    %c0_i32 = arith.constant 0 : i32
    %c0_i32_0 = arith.constant 0 : i32
    %c0_i32_1 = arith.constant 0 : i32
    return %c0_i32, %c0_i32_0 : i32, i32
  }
  func.func @transform_2(%arg0: i32) -> (i32, i32) {
    %c0_i32 = arith.constant 0 : i32
    %c0_i32_0 = arith.constant 0 : i32
    %c0_i32_1 = arith.constant 0 : i32
    return %c0_i32, %c0_i32_0 : i32, i32
  }
  func.func @transform_3(%arg0: i32) -> (i32, i32) {
    %c0_i32 = arith.constant 0 : i32
    %c0_i32_0 = arith.constant 0 : i32
    %c0_i32_1 = arith.constant 0 : i32
    return %c0_i32, %c0_i32_0 : i32, i32
  }
  func.func @transform_4(%arg0: i32) -> (i32, i32) {
    %c0_i32 = arith.constant 0 : i32
    %c0_i32_0 = arith.constant 0 : i32
    %c0_i32_1 = arith.constant 0 : i32
    return %c0_i32, %c0_i32_0 : i32, i32
  }
  func.func @transform_5(%arg0: i32) -> (i32, i32) {
    %c0_i32 = arith.constant 0 : i32
    %c0_i32_0 = arith.constant 0 : i32
    %c0_i32_1 = arith.constant 0 : i32
    return %c0_i32, %c0_i32_0 : i32, i32
  }
  func.func @transform_6(%arg0: i32) -> (i32, i32) {
    %c0_i32 = arith.constant 0 : i32
    %c0_i32_0 = arith.constant 0 : i32
    return %arg0, %c0_i32 : i32, i32
  }
}

</mosaic_0001>

<llo_original>
// kernel: homa_forward.1
$region0: #{homa_forward.1}
  #allocation0 [shape = 'u32[]', space=smem, size = 0x4, offset = 0x4, fixed_abs, tag = 'smem constant byte address 0x4 - core index']
  #allocation1 [shape = 'u32[72,128]{1,0:T(1,128)}', space=vmem, size = 0x9000, scoped, tag = 'internal scratch']
  #allocation2 [shape = 'f32[2,1024]{1,0:T(2,128)}', space=vmem, size = 0x2000, scoped, tag = 'scratch operand']
  #allocation3 [shape = 'bf16[2,2560]{1,0:T(2,128)(2,1)}', space=vmem, size = 0x2800, scoped, tag = 'scratch operand']
  %s0 = inlined_call_operand.vmem [shape: f32[2,1024], index: 0, kind: input, shape index: {}]
  %s1 = inlined_call_operand.vmem [shape: bf16[2560,192], index: 1, kind: input, shape index: {}]
  %s2 = inlined_call_operand.vmem [shape: f32[4,192], index: 2, kind: input, shape index: {}]
  %s3 = inlined_call_operand.vmem [shape: f32[4,192], index: 3, kind: input, shape index: {}]
  %s4 = inlined_call_operand.vmem [shape: f32[192,128], index: 4, kind: input, shape index: {}]
  %s5 = inlined_call_operand.vmem [shape: f32[1,128], index: 5, kind: input, shape index: {}]
  %s6 = inlined_call_operand.hbm [shape: f32[2,128], index: 6, kind: output, shape index: {}]
  %s7 = sld [smem:[#allocation0]]
  $region34: #{homa_forward.1} parent=0
    _
  %s9 = ssub.s32 1, %s7
  %s10 = scalar_select 0, %s9, %s7
  $region1: #{homa_forward.1} parent=0
    #allocation4 [shape = 'u8[1024]{0}', space=vmem, size = 0x400, scoped, tag = 'output window, operand 0, single buffered']
    #allocation5 [shape = 's32[1]{0}', space=sflag, size = 0x4, scoped, tag = 'scoped memory for homa_forward.1']
    %11 = vsyncpa [#allocation5], 0
    // Predicated region
    $region2: #{homa_forward.1} parent=1 // pred_check
      _
    $region3: #{homa_forward.1} parent=1 // pred_check_branch
      %13 = sbr.rel (0) target = $region5
    $region4: #{homa_forward.1} parent=1 // pred_region
      _
    $region5: #{homa_forward.1} parent=1 // pred_fallthru
      _
    // Predicated region
    $region6: #{homa_forward.1} parent=1 // pred_check
      _
    $region7: #{homa_forward.1} parent=1 // pred_check_branch
      %15 = sbr.rel (0) target = $region9
    $region8: #{homa_forward.1} parent=1 // pred_region
      _
    $region9: #{homa_forward.1} parent=1 // pred_fallthru
      _
    // Predicated region
    $region10: #{homa_forward.1} parent=1 // pred_check
      _
    $region11: #{homa_forward.1} parent=1 // pred_check_branch
      %17 = sbr.rel (0) target = $region13
    $region12: #{homa_forward.1} parent=1 // pred_region
      _
    $region13: #{homa_forward.1} parent=1 // pred_fallthru
      _
    // Predicated region
    $region14: #{homa_forward.1} parent=1 // pred_check
      _
    $region15: #{homa_forward.1} parent=1 // pred_check_branch
      %19 = sbr.rel (0) target = $region17
    $region16: #{homa_forward.1} parent=1 // pred_region
      _
    $region17: #{homa_forward.1} parent=1 // pred_fallthru
      _
    // Predicated region
    $region18: #{homa_forward.1} parent=1 // pred_check
      _
    $region19: #{homa_forward.1} parent=1 // pred_check_branch
      %21 = sbr.rel (0) target = $region21
    $region20: #{homa_forward.1} parent=1 // pred_region
      _
    $region21: #{homa_forward.1} parent=1 // pred_fallthru
      _
    // Predicated region
    $region22: #{homa_forward.1} parent=1 // pred_check
      _
    $region23: #{homa_forward.1} parent=1 // pred_check_branch
      %23 = sbr.rel (0) target = $region25
    $region24: #{homa_forward.1} parent=1 // pred_region
      _
    $region25: #{homa_forward.1} parent=1 // pred_fallthru
      _
    %v24 = vld [vmem:[%s0] sm:$0xf]
    %26 = vst [vmem:[#allocation1] ss:$4 sm:$0xff] %v24
    %v27 = vld.sshfl [vmem:[#allocation1] sm:$0xff pattern:$0x73625140]
    %v28 = vld.sshfl [vmem:[#allocation1 + $0x8] sm:$0xff pattern:$0x73625140]
    %vm31 = vcmask 1041408
    %v32 = vsel %vm31, %v27, 0.0
    %v33 = vsel %vm31, %v28, 0.0
    %v34 = vadd.f32 %v32, %v33
    %35 = vadd.xlane.f32.xlu0 %v34
    %v36 = vpop.xlane.xlu0 %35
    %v37 = vrcp.pop 256.0
    %v38 = vmul.f32 256.0, %v37
    %v39 = vsub.f32 1.0, %v38
    %v40 = vmul.f32 %v37, %v39
    %v41 = vadd.f32 %v37, %v40
    %vm42 = vweird.f32 %v37
    %v43 = vsel %vm42, %v37, %v41
    %v44 = vmul.f32 %v36, %v43
    %v47 = vunpack.c.l.s4 269488144
    %v48 = vunpack.c.0.s8 %v47
    %v49 = vperm.slane %v44, %v48
    %v51 = vsub.f32 %v24, %v49
    %52 = vst [vmem:[#allocation2] sm:$0xf] %v51
    %v53 = vmul.f32 %v51, %v51
    %55 = vst [vmem:[#allocation1] ss:$4 sm:$0xff] %v53
    %v56 = vld.sshfl [vmem:[#allocation1] sm:$0xff pattern:$0x73625140]
    %v57 = vld.sshfl [vmem:[#allocation1 + $0x8] sm:$0xff pattern:$0x73625140]
    %v60 = vpack.c.bf16 %v57, %v56
    %v62 = vrot.slane %v60, 3
    %vm63 = vcmask 1040384
    %v66 = vsel %vm63, %v60, %v62
    %68 = vst [vmem:[#allocation3] sm:$0x3] %v66
    %70 = vst [vmem:[#allocation1] ss:$4 sm:$0xff] %v51
    %v71 = vld.sshfl [vmem:[#allocation1] sm:$0xff pattern:$0x73625140]
    %v72 = vld.sshfl [vmem:[#allocation1 + $0x8] sm:$0xff pattern:$0x73625140]
    %v75 = vsel %vm31, %v71, 0.0
    %v76 = vsel %vm31, %v72, 0.0
    %v77 = vadd.f32 %v75, %v76
    %78 = vadd.xlane.f32.xlu0 %v77
    %v79 = vpop.xlane.xlu0 %78
    %v80 = vld [vmem:[%s0 + $0x4] sm:$0xf]
    %82 = vst [vmem:[#allocation1] ss:$4 sm:$0xff] %v80
    %v83 = vld.sshfl [vmem:[#allocation1] sm:$0xff pattern:$0x73625140]
    %v84 = vld.sshfl [vmem:[#allocation1 + $0x8] sm:$0xff pattern:$0x73625140]
    %v87 = vsel %vm31, %v83, 0.0
    %v88 = vsel %vm31, %v84, 0.0
    %v89 = vadd.f32 %v87, %v88
    %90 = vadd.xlane.f32.xlu0 %v89
    %v91 = vpop.xlane.xlu0 %90
    %v92 = vmul.f32 %v91, %v43
    %v95 = vunpack.c.l.s4 269488144
    %v96 = vunpack.c.0.s8 %v95
    %v97 = vperm.slane %v92, %v96
    %v99 = vsub.f32 %v80, %v97
    %100 = vst [vmem:[#allocation2 + $0x4] sm:$0xf] %v99
    %v101 = vmul.f32 %v99, %v99
    %103 = vst [vmem:[#allocation1] ss:$4 sm:$0xff] %v101
    %v104 = vld.sshfl [vmem:[#allocation1] sm:$0xff pattern:$0x73625140]
    %v105 = vld.sshfl [vmem:[#allocation1 + $0x8] sm:$0xff pattern:$0x73625140]
    %v108 = vpack.c.bf16 %v105, %v104
    %v110 = vrot.slane %v108, 3
    %v113 = vsel %vm63, %v108, %v110
    %115 = vst [vmem:[#allocation3 + $0x2] sm:$0x3] %v113
    %117 = vst [vmem:[#allocation1] ss:$4 sm:$0xff] %v99
    %v118 = vld.sshfl [vmem:[#allocation1] sm:$0xff pattern:$0x73625140]
    %v119 = vld.sshfl [vmem:[#allocation1 + $0x8] sm:$0xff pattern:$0x73625140]
    %v122 = vsel %vm31, %v118, 0.0
    %v123 = vsel %vm31, %v119, 0.0
    %v124 = vadd.f32 %v122, %v123
    %125 = vadd.xlane.f32.xlu0 %v124
    %v126 = vpop.xlane.xlu0 %125
    %v127 = vld [vmem:[%s0 + $0x8] sm:$0xf]
    %129 = vst [vmem:[#allocation1] ss:$4 sm:$0xff] %v127
    %v130 = vld.sshfl [vmem:[#allocation1] sm:$0xff pattern:$0x73625140]
    %v131 = vld.sshfl [vmem:[#allocation1 + $0x8] sm:$0xff pattern:$0x73625140]
    %v134 = vsel %vm31, %v130, 0.0
    %v135 = vsel %vm31, %v131, 0.0
    %v136 = vadd.f32 %v134, %v135
    %137 = vadd.xlane.f32.xlu0 %v136
    %v138 = vpop.xlane.xlu0 %137
    %v139 = vmul.f32 %v138, %v43
    %v142 = vunpack.c.l.s4 269488144
    %v143 = vunpack.c.0.s8 %v142
    %v144 = vperm.slane %v139, %v143
    %v146 = vsub.f32 %v127, %v144
    %147 = vst [vmem:[#allocation2 + $0x8] sm:$0xf] %v146
    %v148 = vmul.f32 %v146, %v146
    %150 = vst [vmem:[#allocation1] ss:$4 sm:$0xff] %v148
    %v151 = vld.sshfl [vmem:[#allocation1] sm:$0xff pattern:$0x73625140]
    %v152 = vld.sshfl [vmem:[#allocation1 + $0x8] sm:$0xff pattern:$0x73625140]
    %v155 = vpack.c.bf16 %v152, %v151
    %v157 = vrot.slane %v155, 3
    %v160 = vsel %vm63, %v155, %v157
    %162 = vst [vmem:[#allocation3 + $0x4] sm:$0x3] %v160
    %164 = vst [vmem:[#allocation1] ss:$4 sm:$0xff] %v146
    %v165 = vld.sshfl [vmem:[#allocation1] sm:$0xff pattern:$0x73625140]
    %v166 = vld.sshfl [vmem:[#allocation1 + $0x8] sm:$0xff pattern:$0x73625140]
    %v169 = vsel %vm31, %v165, 0.0
    %v170 = vsel %vm31, %v166, 0.0
    %v171 = vadd.f32 %v169, %v170
    %172 = vadd.xlane.f32.xlu0 %v171
    %v173 = vpop.xlane.xlu0 %172
    %v174 = vld [vmem:[%s0 + $0xc] sm:$0xf]
    %176 = vst [vmem:[#allocation1] ss:$4 sm:$0xff] %v174
    %v177 = vld.sshfl [vmem:[#allocation1] sm:$0xff pattern:$0x73625140]
    %v178 = vld.sshfl [vmem:[#allocation1 + $0x8] sm:$0xff pattern:$0x73625140]
    %v181 = vsel %vm31, %v177, 0.0
    %v182 = vsel %vm31, %v178, 0.0
    %v183 = vadd.f32 %v181, %v182
    %184 = vadd.xlane.f32.xlu0 %v183
    %v185 = vpop.xlane.xlu0 %184
    %v186 = vmul.f32 %v185, %v43
    %v189 = vunpack.c.l.s4 269488144
    %v190 = vunpack.c.0.s8 %v189
    %v191 = vperm.slane %v186, %v190
    %v193 = vsub.f32 %v174, %v191
    %194 = vst [vmem:[#allocation2 + $0xc] sm:$0xf] %v193
    %v195 = vmul.f32 %v193, %v193
    %197 = vst [vmem:[#allocation1] ss:$4 sm:$0xff] %v195
    %v198 = vld.sshfl [vmem:[#allocation1] sm:$0xff pattern:$0x73625140]
    %v199 = vld.sshfl [vmem:[#allocation1 + $0x8] sm:$0xff pattern:$0x73625140]
    %v202 = vpack.c.bf16 %v199, %v198
    %v204 = vrot.slane %v202, 3
    %v207 = vsel %vm63, %v202, %v204
    %209 = vst [vmem:[#allocation3 + $0x6] sm:$0x3] %v207
    %211 = vst [vmem:[#allocation1] ss:$4 sm:$0xff] %v193
    %v212 = vld.sshfl [vmem:[#allocation1] sm:$0xff pattern:$0x73625140]
    %v213 = vld.sshfl [vmem:[#allocation1 + $0x8] sm:$0xff pattern:$0x73625140]
    %v216 = vsel %vm31, %v212, 0.0
    %v217 = vsel %vm31, %v213, 0.0
    %v218 = vadd.f32 %v216, %v217
    %219 = vadd.xlane.f32.xlu0 %v218
    %v220 = vpop.xlane.xlu0 %219
    %v221 = vld [vmem:[#allocation2] sm:$0xf]
    %v222 = vld [vmem:[#allocation2 + $0x4] sm:$0xf]
    %v223 = vmul.f32 %v221, %v222
    %225 = vst [vmem:[#allocation1] ss:$4 sm:$0xff] %v223
    %v226 = vld.sshfl [vmem:[#allocation1] sm:$0xff pattern:$0x73625140]
    %v227 = vld.sshfl [vmem:[#allocation1 + $0x8] sm:$0xff pattern:$0x73625140]
    %v230 = vpack.c.bf16 %v227, %v226
    %v232 = vrot.slane %v230, 3
    %v235 = vsel %vm63, %v230, %v232
    %237 = vst [vmem:[#allocation3 + $0x8] sm:$0x3] %v235
    %v238 = vld [vmem:[#allocation2 + $0x8] sm:$0xf]
    %v239 = vmul.f32 %v221, %v238
    %241 = vst [vmem:[#allocation1] ss:$4 sm:$0xff] %v239
    %v242 = vld.sshfl [vmem:[#allocation1] sm:$0xff pattern:$0x73625140]
    %v243 = vld.sshfl [vmem:[#allocation1 + $0x8] sm:$0xff pattern:$0x73625140]
    %v246 = vpack.c.bf16 %v243, %v242
    %v248 = vrot.slane %v246, 3
    %v251 = vsel %vm63, %v246, %v248
    %253 = vst [vmem:[#allocation3 + $0xa] sm:$0x3] %v251
    %v254 = vld [vmem:[#allocation2 + $0xc] sm:$0xf]
    %v255 = vmul.f32 %v221, %v254
    %257 = vst [vmem:[#allocation1] ss:$4 sm:$0xff] %v255
    %v258 = vld.sshfl [vmem:[#allocation1] sm:$0xff pattern:$0x73625140]
    %v259 = vld.sshfl [vmem:[#allocation1 + $0x8] sm:$0xff pattern:$0x73625140]
    %v262 = vpack.c.bf16 %v259, %v258
    %v264 = vrot.slane %v262, 3
    %v267 = vsel %vm63, %v262, %v264
    %269 = vst [vmem:[#allocation3 + $0xc] sm:$0x3] %v267
    %v270 = vld [vmem:[#allocation2 + $0x4] sm:$0xf]
    %v271 = vld [vmem:[#allocation2 + $0x8] sm:$0xf]
    %v272 = vmul.f32 %v270, %v271
    %274 = vst [vmem:[#allocation1] ss:$4 sm:$0xff] %v272
    %v275 = vld.sshfl [vmem:[#allocation1] sm:$0xff pattern:$0x73625140]
    %v276 = vld.sshfl [vmem:[#allocation1 + $0x8] sm:$0xff pattern:$0x73625140]
    %v279 = vpack.c.bf16 %v276, %v275
    %v281 = vrot.slane %v279, 3
    %v284 = vsel %vm63, %v279, %v281
    %286 = vst [vmem:[#allocation3 + $0xe] sm:$0x3] %v284
    %v287 = vld [vmem:[#allocation2 + $0xc] sm:$0xf]
    %v288 = vmul.f32 %v270, %v287
    %290 = vst [vmem:[#allocation1] ss:$4 sm:$0xff] %v288
    %v291 = vld.sshfl [vmem:[#allocation1] sm:$0xff pattern:$0x73625140]
    %v292 = vld.sshfl [vmem:[#allocation1 + $0x8] sm:$0xff pattern:$0x73625140]
    %v295 = vpack.c.bf16 %v292, %v291
    %v297 = vrot.slane %v295, 3
    %v300 = vsel %vm63, %v295, %v297
    %302 = vst [vmem:[#allocation3 + $0x10] sm:$0x3] %v300
    %v303 = vld [vmem:[#allocation2 + $0x8] sm:$0xf]
    %v304 = vld [vmem:[#allocation2 + $0xc] sm:$0xf]
    %v305 = vmul.f32 %v303, %v304
    %307 = vst [vmem:[#allocation1] ss:$4 sm:$0xff] %v305
    %v308 = vld.sshfl [vmem:[#allocation1] sm:$0xff pattern:$0x73625140]
    %v309 = vld.sshfl [vmem:[#allocation1 + $0x8] sm:$0xff pattern:$0x73625140]
    %v312 = vpack.c.bf16 %v309, %v308
    %v314 = vrot.slane %v312, 3
    %v317 = vsel %vm63, %v312, %v314
    %319 = vst [vmem:[#allocation3 + $0x12] sm:$0x3] %v317
    %v320 = vld [vmem:[#allocation3] sm:$0xff]
    %v321 = vld [vmem:[#allocation3 + $0x8] sm:$0xff]
    %v322 = vld [vmem:[#allocation3 + $0x10] sm:$0xf]
    %v323 = vld [vmem:[%s1] sm:$0xff]
    %v324 = vld [vmem:[%s1 + $0x8] sm:$0xff]
    %v325 = vld [vmem:[%s1 + $0x10] sm:$0xff]
    %v326 = vld [vmem:[%s1 + $0x18] sm:$0xff]
    %v327 = vld [vmem:[%s1 + $0x20] sm:$0xff]
    %v328 = vld [vmem:[%s1 + $0x28] sm:$0xff]
    %v329 = vld [vmem:[%s1 + $0x30] sm:$0xff]
    %v330 = vld [vmem:[%s1 + $0x38] sm:$0xff]
    %v331 = vld [vmem:[%s1 + $0x40] sm:$0xff]
    %v332 = vld [vmem:[%s1 + $0x48] sm:$0xff]
    %v333 = vld [vmem:[%s1 + $0x50] sm:$0xff]
    %v334 = vld [vmem:[%s1 + $0x58] sm:$0xff]
    %v335 = vld [vmem:[%s1 + $0x60] sm:$0xff]
    %v336 = vld [vmem:[%s1 + $0x68] sm:$0xff]
    %v337 = vld [vmem:[%s1 + $0x70] sm:$0xff]
    %v338 = vld [vmem:[%s1 + $0x78] sm:$0xff]
    %v339 = vld [vmem:[%s1 + $0x80] sm:$0xff]
    %v340 = vld [vmem:[%s1 + $0x88] sm:$0xff]
    %v341 = vld [vmem:[%s1 + $0x90] sm:$0xff]
    %v342 = vld [vmem:[%s1 + $0x98] sm:$0xff]
    %v343 = vld [vmem:[%s1 + $0xa0] sm:$0xff]
    %v344 = vld [vmem:[%s1 + $0xa8] sm:$0xff]
    %v345 = vld [vmem:[%s1 + $0xb0] sm:$0xff]
    %v346 = vld [vmem:[%s1 + $0xb8] sm:$0xff]
    %v347 = vld [vmem:[%s1 + $0xc0] sm:$0xff]
    %v348 = vld [vmem:[%s1 + $0xc8] sm:$0xff]
    %v349 = vld [vmem:[%s1 + $0xd0] sm:$0xff]
    %v350 = vld [vmem:[%s1 + $0xd8] sm:$0xff]
    %v351 = vld [vmem:[%s1 + $0xe0] sm:$0xff]
    %v352 = vld [vmem:[%s1 + $0xe8] sm:$0xff]
    %v353 = vld [vmem:[%s1 + $0xf0] sm:$0xff]
    %v354 = vld [vmem:[%s1 + $0xf8] sm:$0xff]
    %v355 = vld [vmem:[%s1 + $0x100] sm:$0xff]
    %v356 = vld [vmem:[%s1 + $0x108] sm:$0xff]
    %v357 = vld [vmem:[%s1 + $0x110] sm:$0xff]
    %v358 = vld [vmem:[%s1 + $0x118] sm:$0xff]
    %v359 = vld [vmem:[%s1 + $0x120] sm:$0xff]
    %v360 = vld [vmem:[%s1 + $0x128] sm:$0xff]
    %v361 = vld [vmem:[%s1 + $0x130] sm:$0xff]
    %v362 = vld [vmem:[%s1 + $0x138] sm:$0xff]
    %v363 = vld [vmem:[%s1 + $0x140] sm:$0xff]
    %v364 = vld [vmem:[%s1 + $0x148] sm:$0xff]
    %v365 = vld [vmem:[%s1 + $0x150] sm:$0xff]
    %v366 = vld [vmem:[%s1 + $0x158] sm:$0xff]
    %v367 = vld [vmem:[%s1 + $0x160] sm:$0xff]
    %v368 = vld [vmem:[%s1 + $0x168] sm:$0xff]
    %v369 = vld [vmem:[%s1 + $0x170] sm:$0xff]
    %v370 = vld [vmem:[%s1 + $0x178] sm:$0xff]
    %v371 = vld [vmem:[%s1 + $0x180] sm:$0xff]
    %v372 = vld [vmem:[%s1 + $0x188] sm:$0xff]
    %v373 = vld [vmem:[%s1 + $0x190] sm:$0xff]
    %v374 = vld [vmem:[%s1 + $0x198] sm:$0xff]
    %v375 = vld [vmem:[%s1 + $0x1a0] sm:$0xff]
    %v376 = vld [vmem:[%s1 + $0x1a8] sm:$0xff]
    %v377 = vld [vmem:[%s1 + $0x1b0] sm:$0xff]
    %v378 = vld [vmem:[%s1 + $0x1b8] sm:$0xff]
    %v379 = vld [vmem:[%s1 + $0x1c0] sm:$0xff]
    %v380 = vld [vmem:[%s1 + $0x1c8] sm:$0xff]
    %v381 = vld [vmem:[%s1 + $0x1d0] sm:$0xff]
    %v382 = vld [vmem:[%s1 + $0x1d8] sm:$0xff]
    %v383 = vld [vmem:[%s1 + $0x1e0] sm:$0xff]
    %v384 = vld [vmem:[%s1 + $0x1e8] sm:$0xff]
    %v385 = vld [vmem:[%s1 + $0x1f0] sm:$0xff]
    %v386 = vld [vmem:[%s1 + $0x1f8] sm:$0xff]
    %v387 = vld [vmem:[%s1 + $0x200] sm:$0xff]
    %v388 = vld [vmem:[%s1 + $0x208] sm:$0xff]
    %v389 = vld [vmem:[%s1 + $0x210] sm:$0xff]
    %v390 = vld [vmem:[%s1 + $0x218] sm:$0xff]
    %v391 = vld [vmem:[%s1 + $0x220] sm:$0xff]
    %v392 = vld [vmem:[%s1 + $0x228] sm:$0xff]
    %v393 = vld [vmem:[%s1 + $0x230] sm:$0xff]
    %v394 = vld [vmem:[%s1 + $0x238] sm:$0xff]
    %v395 = vld [vmem:[%s1 + $0x240] sm:$0xff]
    %v396 = vld [vmem:[%s1 + $0x248] sm:$0xff]
    %v397 = vld [vmem:[%s1 + $0x250] sm:$0xff]
    %v398 = vld [vmem:[%s1 + $0x258] sm:$0xff]
    %v399 = vld [vmem:[%s1 + $0x260] sm:$0xff]
    %v400 = vld [vmem:[%s1 + $0x268] sm:$0xff]
    %v401 = vld [vmem:[%s1 + $0x270] sm:$0xff]
    %v402 = vld [vmem:[%s1 + $0x278] sm:$0xff]
    %v403 = vld [vmem:[%s1 + $0x280] sm:$0xff]
    %v404 = vld [vmem:[%s1 + $0x288] sm:$0xff]
    %v405 = vld [vmem:[%s1 + $0x290] sm:$0xff]
    %v406 = vld [vmem:[%s1 + $0x298] sm:$0xff]
    %v407 = vld [vmem:[%s1 + $0x2a0] sm:$0xff]
    %v408 = vld [vmem:[%s1 + $0x2a8] sm:$0xff]
    %v409 = vld [vmem:[%s1 + $0x2b0] sm:$0xff]
    %v410 = vld [vmem:[%s1 + $0x2b8] sm:$0xff]
    %v411 = vld [vmem:[%s1 + $0x2c0] sm:$0xff]
    %v412 = vld [vmem:[%s1 + $0x2c8] sm:$0xff]
    %v413 = vld [vmem:[%s1 + $0x2d0] sm:$0xff]
    %v414 = vld [vmem:[%s1 + $0x2d8] sm:$0xff]
    %v415 = vld [vmem:[%s1 + $0x2e0] sm:$0xff]
    %v416 = vld [vmem:[%s1 + $0x2e8] sm:$0xff]
    %v417 = vld [vmem:[%s1 + $0x2f0] sm:$0xff]
    %v418 = vld [vmem:[%s1 + $0x2f8] sm:$0xff]
    %v419 = vld [vmem:[%s1 + $0x300] sm:$0xff]
    %v420 = vld [vmem:[%s1 + $0x308] sm:$0xff]
    %v421 = vld [vmem:[%s1 + $0x310] sm:$0xff]
    %v422 = vld [vmem:[%s1 + $0x318] sm:$0xff]
    %v423 = vld [vmem:[%s1 + $0x320] sm:$0xff]
    %v424 = vld [vmem:[%s1 + $0x328] sm:$0xff]
    %v425 = vld [vmem:[%s1 + $0x330] sm:$0xff]
    %v426 = vld [vmem:[%s1 + $0x338] sm:$0xff]
    %v427 = vld [vmem:[%s1 + $0x340] sm:$0xff]
    %v428 = vld [vmem:[%s1 + $0x348] sm:$0xff]
    %v429 = vld [vmem:[%s1 + $0x350] sm:$0xff]
    %v430 = vld [vmem:[%s1 + $0x358] sm:$0xff]
    %v431 = vld [vmem:[%s1 + $0x360] sm:$0xff]
    %v432 = vld [vmem:[%s1 + $0x368] sm:$0xff]
    %v433 = vld [vmem:[%s1 + $0x370] sm:$0xff]
    %v434 = vld [vmem:[%s1 + $0x378] sm:$0xff]
    %v435 = vld [vmem:[%s1 + $0x380] sm:$0xff]
    %v436 = vld [vmem:[%s1 + $0x388] sm:$0xff]
    %v437 = vld [vmem:[%s1 + $0x390] sm:$0xff]
    %v438 = vld [vmem:[%s1 + $0x398] sm:$0xff]
    %v439 = vld [vmem:[%s1 + $0x3a0] sm:$0xff]
    %v440 = vld [vmem:[%s1 + $0x3a8] sm:$0xff]
    %v441 = vld [vmem:[%s1 + $0x3b0] sm:$0xff]
    %v442 = vld [vmem:[%s1 + $0x3b8] sm:$0xff]
    %v443 = vld [vmem:[%s1 + $0x3c0] sm:$0xff]
    %v444 = vld [vmem:[%s1 + $0x3c8] sm:$0xff]
    %v445 = vld [vmem:[%s1 + $0x3d0] sm:$0xff]
    %v446 = vld [vmem:[%s1 + $0x3d8] sm:$0xff]
    %v447 = vld [vmem:[%s1 + $0x3e0] sm:$0xff]
    %v448 = vld [vmem:[%s1 + $0x3e8] sm:$0xff]
    %v449 = vld [vmem:[%s1 + $0x3f0] sm:$0xff]
    %v450 = vld [vmem:[%s1 + $0x3f8] sm:$0xff]
    %v451 = vld [vmem:[%s1 + $0x400] sm:$0xff]
    %v452 = vld [vmem:[%s1 + $0x408] sm:$0xff]
    %v453 = vld [vmem:[%s1 + $0x410] sm:$0xff]
    %v454 = vld [vmem:[%s1 + $0x418] sm:$0xff]
    %v455 = vld [vmem:[%s1 + $0x420] sm:$0xff]
    %v456 = vld [vmem:[%s1 + $0x428] sm:$0xff]
    %v457 = vld [vmem:[%s1 + $0x430] sm:$0xff]
    %v458 = vld [vmem:[%s1 + $0x438] sm:$0xff]
    %v459 = vld [vmem:[%s1 + $0x440] sm:$0xff]
    %v460 = vld [vmem:[%s1 + $0x448] sm:$0xff]
    %v461 = vld [vmem:[%s1 + $0x450] sm:$0xff]
    %v462 = vld [vmem:[%s1 + $0x458] sm:$0xff]
    %v463 = vld [vmem:[%s1 + $0x460] sm:$0xff]
    %v464 = vld [vmem:[%s1 + $0x468] sm:$0xff]
    %v465 = vld [vmem:[%s1 + $0x470] sm:$0xff]
    %v466 = vld [vmem:[%s1 + $0x478] sm:$0xff]
    %v467 = vld [vmem:[%s1 + $0x480] sm:$0xff]
    %v468 = vld [vmem:[%s1 + $0x488] sm:$0xff]
    %v469 = vld [vmem:[%s1 + $0x490] sm:$0xff]
    %v470 = vld [vmem:[%s1 + $0x498] sm:$0xff]
    %v471 = vld [vmem:[%s1 + $0x4a0] sm:$0xff]
    %v472 = vld [vmem:[%s1 + $0x4a8] sm:$0xff]
    %v473 = vld [vmem:[%s1 + $0x4b0] sm:$0xff]
    %v474 = vld [vmem:[%s1 + $0x4b8] sm:$0xff]
    %v475 = vld [vmem:[%s1 + $0x4c0] sm:$0xff]
    %v476 = vld [vmem:[%s1 + $0x4c8] sm:$0xff]
    %v477 = vld [vmem:[%s1 + $0x4d0] sm:$0xff]
    %v478 = vld [vmem:[%s1 + $0x4d8] sm:$0xff]
    %v479 = vld [vmem:[%s1 + $0x4e0] sm:$0xff]
    %v480 = vld [vmem:[%s1 + $0x4e8] sm:$0xff]
    %v481 = vld [vmem:[%s1 + $0x4f0] sm:$0xff]
    %v482 = vld [vmem:[%s1 + $0x4f8] sm:$0xff]
    %v483 = vld [vmem:[%s1 + $0x500] sm:$0xff]
    %v484 = vld [vmem:[%s1 + $0x508] sm:$0xff]
    %v485 = vld [vmem:[%s1 + $0x510] sm:$0xff]
    %v486 = vld [vmem:[%s1 + $0x518] sm:$0xff]
    %v487 = vld [vmem:[%s1 + $0x520] sm:$0xff]
    %v488 = vld [vmem:[%s1 + $0x528] sm:$0xff]
    %v489 = vld [vmem:[%s1 + $0x530] sm:$0xff]
    %v490 = vld [vmem:[%s1 + $0x538] sm:$0xff]
    %v491 = vld [vmem:[%s1 + $0x540] sm:$0xff]
    %v492 = vld [vmem:[%s1 + $0x548] sm:$0xff]
    %v493 = vld [vmem:[%s1 + $0x550] sm:$0xff]
    %v494 = vld [vmem:[%s1 + $0x558] sm:$0xff]
    %v495 = vld [vmem:[%s1 + $0x560] sm:$0xff]
    %v496 = vld [vmem:[%s1 + $0x568] sm:$0xff]
    %v497 = vld [vmem:[%s1 + $0x570] sm:$0xff]
    %v498 = vld [vmem:[%s1 + $0x578] sm:$0xff]
    %v499 = vld [vmem:[%s1 + $0x580] sm:$0xff]
    %v500 = vld [vmem:[%s1 + $0x588] sm:$0xff]
    %v501 = vld [vmem:[%s1 + $0x590] sm:$0xff]
    %v502 = vld [vmem:[%s1 + $0x598] sm:$0xff]
    %v503 = vld [vmem:[%s1 + $0x5a0] sm:$0xff]
    %v504 = vld [vmem:[%s1 + $0x5a8] sm:$0xff]
    %v505 = vld [vmem:[%s1 + $0x5b0] sm:$0xff]
    %v506 = vld [vmem:[%s1 + $0x5b8] sm:$0xff]
    %v507 = vld [vmem:[%s1 + $0x5c0] sm:$0xff]
    %v508 = vld [vmem:[%s1 + $0x5c8] sm:$0xff]
    %v509 = vld [vmem:[%s1 + $0x5d0] sm:$0xff]
    %v510 = vld [vmem:[%s1 + $0x5d8] sm:$0xff]
    %v511 = vld [vmem:[%s1 + $0x5e0] sm:$0xff]
    %v512 = vld [vmem:[%s1 + $0x5e8] sm:$0xff]
    %v513 = vld [vmem:[%s1 + $0x5f0] sm:$0xff]
    %v514 = vld [vmem:[%s1 + $0x5f8] sm:$0xff]
    %v515 = vld [vmem:[%s1 + $0x600] sm:$0xff]
    %v516 = vld [vmem:[%s1 + $0x608] sm:$0xff]
    %v517 = vld [vmem:[%s1 + $0x610] sm:$0xff]
    %v518 = vld [vmem:[%s1 + $0x618] sm:$0xff]
    %v519 = vld [vmem:[%s1 + $0x620] sm:$0xff]
    %v520 = vld [vmem:[%s1 + $0x628] sm:$0xff]
    %v521 = vld [vmem:[%s1 + $0x630] sm:$0xff]
    %v522 = vld [vmem:[%s1 + $0x638] sm:$0xff]
    %v523 = vld [vmem:[%s1 + $0x640] sm:$0xff]
    %v524 = vld [vmem:[%s1 + $0x648] sm:$0xff]
    %v525 = vld [vmem:[%s1 + $0x650] sm:$0xff]
    %v526 = vld [vmem:[%s1 + $0x658] sm:$0xff]
    %v527 = vld [vmem:[%s1 + $0x660] sm:$0xff]
    %v528 = vld [vmem:[%s1 + $0x668] sm:$0xff]
    %v529 = vld [vmem:[%s1 + $0x670] sm:$0xff]
    %v530 = vld [vmem:[%s1 + $0x678] sm:$0xff]
    %v531 = vld [vmem:[%s1 + $0x680] sm:$0xff]
    %v532 = vld [vmem:[%s1 + $0x688] sm:$0xff]
    %v533 = vld [vmem:[%s1 + $0x690] sm:$0xff]
    %v534 = vld [vmem:[%s1 + $0x698] sm:$0xff]
    %v535 = vld [vmem:[%s1 + $0x6a0] sm:$0xff]
    %v536 = vld [vmem:[%s1 + $0x6a8] sm:$0xff]
    %v537 = vld [vmem:[%s1 + $0x6b0] sm:$0xff]
    %v538 = vld [vmem:[%s1 + $0x6b8] sm:$0xff]
    %v539 = vld [vmem:[%s1 + $0x6c0] sm:$0xff]
    %v540 = vld [vmem:[%s1 + $0x6c8] sm:$0xff]
    %v541 = vld [vmem:[%s1 + $0x6d0] sm:$0xff]
    %v542 = vld [vmem:[%s1 + $0x6d8] sm:$0xff]
    %v543 = vld [vmem:[%s1 + $0x6e0] sm:$0xff]
    %v544 = vld [vmem:[%s1 + $0x6e8] sm:$0xff]
    %v545 = vld [vmem:[%s1 + $0x6f0] sm:$0xff]
    %v546 = vld [vmem:[%s1 + $0x6f8] sm:$0xff]
    %v547 = vld [vmem:[%s1 + $0x700] sm:$0xff]
    %v548 = vld [vmem:[%s1 + $0x708] sm:$0xff]
    %v549 = vld [vmem:[%s1 + $0x710] sm:$0xff]
    %v550 = vld [vmem:[%s1 + $0x718] sm:$0xff]
    %v551 = vld [vmem:[%s1 + $0x720] sm:$0xff]
    %v552 = vld [vmem:[%s1 + $0x728] sm:$0xff]
    %v553 = vld [vmem:[%s1 + $0x730] sm:$0xff]
    %v554 = vld [vmem:[%s1 + $0x738] sm:$0xff]
    %v555 = vld [vmem:[%s1 + $0x740] sm:$0xff]
    %v556 = vld [vmem:[%s1 + $0x748] sm:$0xff]
    %v557 = vld [vmem:[%s1 + $0x750] sm:$0xff]
    %v558 = vld [vmem:[%s1 + $0x758] sm:$0xff]
    %v559 = vld [vmem:[%s1 + $0x760] sm:$0xff]
    %v560 = vld [vmem:[%s1 + $0x768] sm:$0xff]
    %v561 = vld [vmem:[%s1 + $0x770] sm:$0xff]
    %v562 = vld [vmem:[%s1 + $0x778] sm:$0xff]
    %v563 = vld [vmem:[%s1 + $0x780] sm:$0xff]
    %v564 = vld [vmem:[%s1 + $0x788] sm:$0xff]
    %v565 = vld [vmem:[%s1 + $0x790] sm:$0xff]
    %v566 = vld [vmem:[%s1 + $0x798] sm:$0xff]
    %v567 = vld [vmem:[%s1 + $0x7a0] sm:$0xff]
    %v568 = vld [vmem:[%s1 + $0x7a8] sm:$0xff]
    %v569 = vld [vmem:[%s1 + $0x7b0] sm:$0xff]
    %v570 = vld [vmem:[%s1 + $0x7b8] sm:$0xff]
    %v571 = vld [vmem:[%s1 + $0x7c0] sm:$0xff]
    %v572 = vld [vmem:[%s1 + $0x7c8] sm:$0xff]
    %v573 = vld [vmem:[%s1 + $0x7d0] sm:$0xff]
    %v574 = vld [vmem:[%s1 + $0x7d8] sm:$0xff]
    %v575 = vld [vmem:[%s1 + $0x7e0] sm:$0xff]
    %v576 = vld [vmem:[%s1 + $0x7e8] sm:$0xff]
    %v577 = vld [vmem:[%s1 + $0x7f0] sm:$0xff]
    %v578 = vld [vmem:[%s1 + $0x7f8] sm:$0xff]
    %v579 = vld [vmem:[%s1 + $0x800] sm:$0xff]
    %v580 = vld [vmem:[%s1 + $0x808] sm:$0xff]
    %v581 = vld [vmem:[%s1 + $0x810] sm:$0xff]
    %v582 = vld [vmem:[%s1 + $0x818] sm:$0xff]
    %v583 = vld [vmem:[%s1 + $0x820] sm:$0xff]
    %v584 = vld [vmem:[%s1 + $0x828] sm:$0xff]
    %v585 = vld [vmem:[%s1 + $0x830] sm:$0xff]
    %v586 = vld [vmem:[%s1 + $0x838] sm:$0xff]
    %v587 = vld [vmem:[%s1 + $0x840] sm:$0xff]
    %v588 = vld [vmem:[%s1 + $0x848] sm:$0xff]
    %v589 = vld [vmem:[%s1 + $0x850] sm:$0xff]
    %v590 = vld [vmem:[%s1 + $0x858] sm:$0xff]
    %v591 = vld [vmem:[%s1 + $0x860] sm:$0xff]
    %v592 = vld [vmem:[%s1 + $0x868] sm:$0xff]
    %v593 = vld [vmem:[%s1 + $0x870] sm:$0xff]
    %v594 = vld [vmem:[%s1 + $0x878] sm:$0xff]
    %v595 = vld [vmem:[%s1 + $0x880] sm:$0xff]
    %v596 = vld [vmem:[%s1 + $0x888] sm:$0xff]
    %v597 = vld [vmem:[%s1 + $0x890] sm:$0xff]
    %v598 = vld [vmem:[%s1 + $0x898] sm:$0xff]
    %v599 = vld [vmem:[%s1 + $0x8a0] sm:$0xff]
    %v600 = vld [vmem:[%s1 + $0x8a8] sm:$0xff]
    %v601 = vld [vmem:[%s1 + $0x8b0] sm:$0xff]
    %v602 = vld [vmem:[%s1 + $0x8b8] sm:$0xff]
    %v603 = vld [vmem:[%s1 + $0x8c0] sm:$0xff]
    %v604 = vld [vmem:[%s1 + $0x8c8] sm:$0xff]
    %v605 = vld [vmem:[%s1 + $0x8d0] sm:$0xff]
    %v606 = vld [vmem:[%s1 + $0x8d8] sm:$0xff]
    %v607 = vld [vmem:[%s1 + $0x8e0] sm:$0xff]
    %v608 = vld [vmem:[%s1 + $0x8e8] sm:$0xff]
    %v609 = vld [vmem:[%s1 + $0x8f0] sm:$0xff]
    %v610 = vld [vmem:[%s1 + $0x8f8] sm:$0xff]
    %v611 = vld [vmem:[%s1 + $0x900] sm:$0xff]
    %v612 = vld [vmem:[%s1 + $0x908] sm:$0xff]
    %v613 = vld [vmem:[%s1 + $0x910] sm:$0xff]
    %v614 = vld [vmem:[%s1 + $0x918] sm:$0xff]
    %v615 = vld [vmem:[%s1 + $0x920] sm:$0xff]
    %v616 = vld [vmem:[%s1 + $0x928] sm:$0xff]
    %v617 = vld [vmem:[%s1 + $0x930] sm:$0xff]
    %v618 = vld [vmem:[%s1 + $0x938] sm:$0xff]
    %v619 = vld [vmem:[%s1 + $0x940] sm:$0xff]
    %v620 = vld [vmem:[%s1 + $0x948] sm:$0xff]
    %v621 = vld [vmem:[%s1 + $0x950] sm:$0xff]
    %v622 = vld [vmem:[%s1 + $0x958] sm:$0xff]
    %v623 = vld [vmem:[%s1 + $0x960] sm:$0xff]
    %v624 = vld [vmem:[%s1 + $0x968] sm:$0xff]
    %v625 = vld [vmem:[%s1 + $0x970] sm:$0xff]
    %v626 = vld [vmem:[%s1 + $0x978] sm:$0xff]
    %v627 = vld [vmem:[%s1 + $0x980] sm:$0xff]
    %v628 = vld [vmem:[%s1 + $0x988] sm:$0xff]
    %v629 = vld [vmem:[%s1 + $0x990] sm:$0xff]
    %v630 = vld [vmem:[%s1 + $0x998] sm:$0xff]
    %v631 = vld [vmem:[%s1 + $0x9a0] sm:$0xff]
    %v632 = vld [vmem:[%s1 + $0x9a8] sm:$0xff]
    %v633 = vld [vmem:[%s1 + $0x9b0] sm:$0xff]
    %v634 = vld [vmem:[%s1 + $0x9b8] sm:$0xff]
    %v635 = vld [vmem:[%s1 + $0x9c0] sm:$0xff]
    %v636 = vld [vmem:[%s1 + $0x9c8] sm:$0xff]
    %v637 = vld [vmem:[%s1 + $0x9d0] sm:$0xff]
    %v638 = vld [vmem:[%s1 + $0x9d8] sm:$0xff]
    %v639 = vld [vmem:[%s1 + $0x9e0] sm:$0xff]
    %v640 = vld [vmem:[%s1 + $0x9e8] sm:$0xff]
    %v641 = vld [vmem:[%s1 + $0x9f0] sm:$0xff]
    %v642 = vld [vmem:[%s1 + $0x9f8] sm:$0xff]
    %v643 = vld [vmem:[%s2] sm:$0xff]
    %v644 = vld [vmem:[%s3] sm:$0xff]
    %v645 = vmul.f32 %v79, 0.00390625
    %v647 = vperm.slane %v643, 0
    %v648 = vperm.slane %v643, 4
    %v651 = vperm.slane %v647, 0
    %v652 = vperm.slane %v648, 0
    %v653 = vmul.f32 %v79, %v651
    %v654 = vmul.f32 %v79, %v652
    %656 = vst [vmem:[#allocation1] ss:$9 sm:$0xff] %v320
    %v657 = vld [vmem:[#allocation1] sm:$0xff]
    %v658 = vld [vmem:[#allocation1 + $0x9] sm:$0xff]
    %v659 = vld [vmem:[#allocation1 + $0x12] sm:$0xff]
    %v660 = vld [vmem:[#allocation1 + $0x1b] sm:$0xff]
    %v661 = vld [vmem:[#allocation1 + $0x24] sm:$0xff]
    %v662 = vld [vmem:[#allocation1 + $0x2d] sm:$0xff]
    %v663 = vld [vmem:[#allocation1 + $0x36] sm:$0xff]
    %v664 = vld [vmem:[#allocation1 + $0x3f] sm:$0xff]
    %666 = vst [vmem:[#allocation1] ss:$9 sm:$0xff] %v321
    %v667 = vld [vmem:[#allocation1] sm:$0xff]
    %v668 = vld [vmem:[#allocation1 + $0x9] sm:$0xff]
    %v669 = vld [vmem:[#allocation1 + $0x12] sm:$0xff]
    %v670 = vld [vmem:[#allocation1 + $0x1b] sm:$0xff]
    %v671 = vld [vmem:[#allocation1 + $0x24] sm:$0xff]
    %v672 = vld [vmem:[#allocation1 + $0x2d] sm:$0xff]
    %v673 = vld [vmem:[#allocation1 + $0x36] sm:$0xff]
    %v674 = vld [vmem:[#allocation1 + $0x3f] sm:$0xff]
    %676 = vst [vmem:[#allocation1] ss:$9 sm:$0xff] %v322
    %v677 = vld [vmem:[#allocation1] sm:$0xff]
    %v678 = vld [vmem:[#allocation1 + $0x9] sm:$0xff]
    %v679 = vld [vmem:[#allocation1 + $0x12] sm:$0xff]
    %v680 = vld [vmem:[#allocation1 + $0x1b] sm:$0xff]
    %v1021 = vunpack.c.l.b16 %v323
    %v1022 = vunpack.c.h.b16 %v323
    %v1023 = vunpack.c.l.b16 %v324
    %v1024 = vunpack.c.h.b16 %v324
    %v1025 = vunpack.c.l.b16 %v325
    %v1026 = vunpack.c.h.b16 %v325
    %v1027 = vunpack.c.l.b16 %v326
    %v1028 = vunpack.c.h.b16 %v326
    %v1029 = vunpack.c.l.b16 %v327
    %v1030 = vunpack.c.h.b16 %v327
    %v1031 = vunpack.c.l.b16 %v328
    %v1032 = vunpack.c.h.b16 %v328
    %v1033 = vunpack.c.l.b16 %v329
    %v1034 = vunpack.c.h.b16 %v329
    %v1035 = vunpack.c.l.b16 %v330
    %v1036 = vunpack.c.h.b16 %v330
    %v1037 = vunpack.c.l.b16 %v331
    %v1038 = vunpack.c.h.b16 %v331
    %v1039 = vunpack.c.l.b16 %v332
    %v1040 = vunpack.c.h.b16 %v332
    %v1041 = vunpack.c.l.b16 %v333
    %v1042 = vunpack.c.h.b16 %v333
    %v1043 = vunpack.c.l.b16 %v334
    %v1044 = vunpack.c.h.b16 %v334
    %v1045 = vunpack.c.l.b16 %v335
    %v1046 = vunpack.c.h.b16 %v335
    %v1047 = vunpack.c.l.b16 %v336
    %v1048 = vunpack.c.h.b16 %v336
    %v1049 = vunpack.c.l.b16 %v337
    %v1050 = vunpack.c.h.b16 %v337
    %v1051 = vunpack.c.l.b16 %v338
    %v1052 = vunpack.c.h.b16 %v338
    %v1053 = vunpack.c.l.b16 %v339
    %v1054 = vunpack.c.h.b16 %v339
    %v1055 = vunpack.c.l.b16 %v340
    %v1056 = vunpack.c.h.b16 %v340
    %v1057 = vunpack.c.l.b16 %v341
    %v1058 = vunpack.c.h.b16 %v341
    %v1059 = vunpack.c.l.b16 %v342
    %v1060 = vunpack.c.h.b16 %v342
    %v1061 = vunpack.c.l.b16 %v343
    %v1062 = vunpack.c.h.b16 %v343
    %v1063 = vunpack.c.l.b16 %v344
    %v1064 = vunpack.c.h.b16 %v344
    %v1065 = vunpack.c.l.b16 %v345
    %v1066 = vunpack.c.h.b16 %v345
    %v1067 = vunpack.c.l.b16 %v346
    %v1068 = vunpack.c.h.b16 %v346
    %v1069 = vunpack.c.l.b16 %v347
    %v1070 = vunpack.c.h.b16 %v347
    %v1071 = vunpack.c.l.b16 %v348
    %v1072 = vunpack.c.h.b16 %v348
    %v1073 = vunpack.c.l.b16 %v349
    %v1074 = vunpack.c.h.b16 %v349
    %v1075 = vunpack.c.l.b16 %v350
    %v1076 = vunpack.c.h.b16 %v350
    %v1077 = vunpack.c.l.b16 %v351
    %v1078 = vunpack.c.h.b16 %v351
    %v1079 = vunpack.c.l.b16 %v352
    %v1080 = vunpack.c.h.b16 %v352
    %v1081 = vunpack.c.l.b16 %v353
    %v1082 = vunpack.c.h.b16 %v353
    %v1083 = vunpack.c.l.b16 %v354
    %v1084 = vunpack.c.h.b16 %v354
    %v1085 = vunpack.c.l.b16 %v355
    %v1086 = vunpack.c.h.b16 %v355
    %v1087 = vunpack.c.l.b16 %v356
    %v1088 = vunpack.c.h.b16 %v356
    %v1089 = vunpack.c.l.b16 %v357
    %v1090 = vunpack.c.h.b16 %v357
    %v1091 = vunpack.c.l.b16 %v358
    %v1092 = vunpack.c.h.b16 %v358
    %v1093 = vunpack.c.l.b16 %v359
    %v1094 = vunpack.c.h.b16 %v359
    %v1095 = vunpack.c.l.b16 %v360
    %v1096 = vunpack.c.h.b16 %v360
    %v1097 = vunpack.c.l.b16 %v361
    %v1098 = vunpack.c.h.b16 %v361
    %v1099 = vunpack.c.l.b16 %v362
    %v1100 = vunpack.c.h.b16 %v362
    %v1101 = vunpack.c.l.b16 %v363
    %v1102 = vunpack.c.h.b16 %v363
    %v1103 = vunpack.c.l.b16 %v364
    %v1104 = vunpack.c.h.b16 %v364
    %v1105 = vunpack.c.l.b16 %v365
    %v1106 = vunpack.c.h.b16 %v365
    %v1107 = vunpack.c.l.b16 %v366
    %v1108 = vunpack.c.h.b16 %v366
    %v1109 = vunpack.c.l.b16 %v367
    %v1110 = vunpack.c.h.b16 %v367
    %v1111 = vunpack.c.l.b16 %v368
    %v1112 = vunpack.c.h.b16 %v368
    %v1113 = vunpack.c.l.b16 %v369
    %v1114 = vunpack.c.h.b16 %v369
    %v1115 = vunpack.c.l.b16 %v370
    %v1116 = vunpack.c.h.b16 %v370
    %v1117 = vunpack.c.l.b16 %v371
    %v1118 = vunpack.c.h.b16 %v371
    %v1119 = vunpack.c.l.b16 %v372
    %v1120 = vunpack.c.h.b16 %v372
    %v1121 = vunpack.c.l.b16 %v373
    %v1122 = vunpack.c.h.b16 %v373
    %v1123 = vunpack.c.l.b16 %v374
    %v1124 = vunpack.c.h.b16 %v374
    %v1125 = vunpack.c.l.b16 %v375
    %v1126 = vunpack.c.h.b16 %v375
    %v1127 = vunpack.c.l.b16 %v376
    %v1128 = vunpack.c.h.b16 %v376
    %v1129 = vunpack.c.l.b16 %v377
    %v1130 = vunpack.c.h.b16 %v377
    %v1131 = vunpack.c.l.b16 %v378
    %v1132 = vunpack.c.h.b16 %v378
    %v1133 = vunpack.c.l.b16 %v379
    %v1134 = vunpack.c.h.b16 %v379
    %v1135 = vunpack.c.l.b16 %v380
    %v1136 = vunpack.c.h.b16 %v380
    %v1137 = vunpack.c.l.b16 %v381
    %v1138 = vunpack.c.h.b16 %v381
    %v1139 = vunpack.c.l.b16 %v382
    %v1140 = vunpack.c.h.b16 %v382
    %v1141 = vunpack.c.l.b16 %v383
    %v1142 = vunpack.c.h.b16 %v383
    %v1143 = vunpack.c.l.b16 %v384
    %v1144 = vunpack.c.h.b16 %v384
    %v1145 = vunpack.c.l.b16 %v385
    %v1146 = vunpack.c.h.b16 %v385
    %v1147 = vunpack.c.l.b16 %v386
    %v1148 = vunpack.c.h.b16 %v386
    %v1149 = vunpack.c.l.b16 %v387
    %v1150 = vunpack.c.h.b16 %v387
    %v1151 = vunpack.c.l.b16 %v388
    %v1152 = vunpack.c.h.b16 %v388
    %v1153 = vunpack.c.l.b16 %v389
    %v1154 = vunpack.c.h.b16 %v389
    %v1155 = vunpack.c.l.b16 %v390
    %v1156 = vunpack.c.h.b16 %v390
    %v1157 = vunpack.c.l.b16 %v391
    %v1158 = vunpack.c.h.b16 %v391
    %v1159 = vunpack.c.l.b16 %v392
    %v1160 = vunpack.c.h.b16 %v392
    %v1161 = vunpack.c.l.b16 %v393
    %v1162 = vunpack.c.h.b16 %v393
    %v1163 = vunpack.c.l.b16 %v394
    %v1164 = vunpack.c.h.b16 %v394
    %v1165 = vunpack.c.l.b16 %v395
    %v1166 = vunpack.c.h.b16 %v395
    %v1167 = vunpack.c.l.b16 %v396
    %v1168 = vunpack.c.h.b16 %v396
    %v1169 = vunpack.c.l.b16 %v397
    %v1170 = vunpack.c.h.b16 %v397
    %v1171 = vunpack.c.l.b16 %v398
    %v1172 = vunpack.c.h.b16 %v398
    %v1173 = vunpack.c.l.b16 %v399
    %v1174 = vunpack.c.h.b16 %v399
    %v1175 = vunpack.c.l.b16 %v400
    %v1176 = vunpack.c.h.b16 %v400
    %v1177 = vunpack.c.l.b16 %v401
    %v1178 = vunpack.c.h.b16 %v401
    %v1179 = vunpack.c.l.b16 %v402
    %v1180 = vunpack.c.h.b16 %v402
    %v1181 = vunpack.c.l.b16 %v403
    %v1182 = vunpack.c.h.b16 %v403
    %v1183 = vunpack.c.l.b16 %v404
    %v1184 = vunpack.c.h.b16 %v404
    %v1185 = vunpack.c.l.b16 %v405
    %v1186 = vunpack.c.h.b16 %v405
    %v1187 = vunpack.c.l.b16 %v406
    %v1188 = vunpack.c.h.b16 %v406
    %v1189 = vunpack.c.l.b16 %v407
    %v1190 = vunpack.c.h.b16 %v407
    %v1191 = vunpack.c.l.b16 %v408
    %v1192 = vunpack.c.h.b16 %v408
    %v1193 = vunpack.c.l.b16 %v409
    %v1194 = vunpack.c.h.b16 %v409
    %v1195 = vunpack.c.l.b16 %v410
    %v1196 = vunpack.c.h.b16 %v410
    %v1197 = vunpack.c.l.b16 %v411
    %v1198 = vunpack.c.h.b16 %v411
    %v1199 = vunpack.c.l.b16 %v412
    %v1200 = vunpack.c.h.b16 %v412
    %v1201 = vunpack.c.l.b16 %v413
    %v1202 = vunpack.c.h.b16 %v413
    %v1203 = vunpack.c.l.b16 %v414
    %v1204 = vunpack.c.h.b16 %v414
    %v1205 = vunpack.c.l.b16 %v415
    %v1206 = vunpack.c.h.b16 %v415
    %v1207 = vunpack.c.l.b16 %v416
    %v1208 = vunpack.c.h.b16 %v416
    %v1209 = vunpack.c.l.b16 %v417
    %v1210 = vunpack.c.h.b16 %v417
    %v1211 = vunpack.c.l.b16 %v418
    %v1212 = vunpack.c.h.b16 %v418
    %v1213 = vunpack.c.l.b16 %v419
    %v1214 = vunpack.c.h.b16 %v419
    %v1215 = vunpack.c.l.b16 %v420
    %v1216 = vunpack.c.h.b16 %v420
    %v1217 = vunpack.c.l.b16 %v421
    %v1218 = vunpack.c.h.b16 %v421
    %v1219 = vunpack.c.l.b16 %v422
    %v1220 = vunpack.c.h.b16 %v422
    %v1221 = vunpack.c.l.b16 %v423
    %v1222 = vunpack.c.h.b16 %v423
    %v1223 = vunpack.c.l.b16 %v424
    %v1224 = vunpack.c.h.b16 %v424
    %v1225 = vunpack.c.l.b16 %v425
    %v1226 = vunpack.c.h.b16 %v425
    %v1227 = vunpack.c.l.b16 %v426
    %v1228 = vunpack.c.h.b16 %v426
    %v1229 = vunpack.c.l.b16 %v427
    %v1230 = vunpack.c.h.b16 %v427
    %v1231 = vunpack.c.l.b16 %v428
    %v1232 = vunpack.c.h.b16 %v428
    %v1233 = vunpack.c.l.b16 %v429
    %v1234 = vunpack.c.h.b16 %v429
    %v1235 = vunpack.c.l.b16 %v430
    %v1236 = vunpack.c.h.b16 %v430
    %v1237 = vunpack.c.l.b16 %v431
    %v1238 = vunpack.c.h.b16 %v431
    %v1239 = vunpack.c.l.b16 %v432
    %v1240 = vunpack.c.h.b16 %v432
    %v1241 = vunpack.c.l.b16 %v433
    %v1242 = vunpack.c.h.b16 %v433
    %v1243 = vunpack.c.l.b16 %v434
    %v1244 = vunpack.c.h.b16 %v434
    %v1245 = vunpack.c.l.b16 %v435
    %v1246 = vunpack.c.h.b16 %v435
    %v1247 = vunpack.c.l.b16 %v436
    %v1248 = vunpack.c.h.b16 %v436
    %v1249 = vunpack.c.l.b16 %v437
    %v1250 = vunpack.c.h.b16 %v437
    %v1251 = vunpack.c.l.b16 %v438
    %v1252 = vunpack.c.h.b16 %v438
    %v1253 = vunpack.c.l.b16 %v439
    %v1254 = vunpack.c.h.b16 %v439
    %v1255 = vunpack.c.l.b16 %v440
    %v1256 = vunpack.c.h.b16 %v440
    %v1257 = vunpack.c.l.b16 %v441
    %v1258 = vunpack.c.h.b16 %v441
    %v1259 = vunpack.c.l.b16 %v442
    %v1260 = vunpack.c.h.b16 %v442
    %v1261 = vunpack.c.l.b16 %v443
    %v1262 = vunpack.c.h.b16 %v443
    %v1263 = vunpack.c.l.b16 %v444
    %v1264 = vunpack.c.h.b16 %v444
    %v1265 = vunpack.c.l.b16 %v445
    %v1266 = vunpack.c.h.b16 %v445
    %v1267 = vunpack.c.l.b16 %v446
    %v1268 = vunpack.c.h.b16 %v446
    %v1269 = vunpack.c.l.b16 %v447
    %v1270 = vunpack.c.h.b16 %v447
    %v1271 = vunpack.c.l.b16 %v448
    %v1272 = vunpack.c.h.b16 %v448
    %v1273 = vunpack.c.l.b16 %v449
    %v1274 = vunpack.c.h.b16 %v449
    %v1275 = vunpack.c.l.b16 %v450
    %v1276 = vunpack.c.h.b16 %v450
    %v1277 = vunpack.c.l.b16 %v451
    %v1278 = vunpack.c.h.b16 %v451
    %v1279 = vunpack.c.l.b16 %v452
    %v1280 = vunpack.c.h.b16 %v452
    %v1281 = vunpack.c.l.b16 %v453
    %v1282 = vunpack.c.h.b16 %v453
    %v1283 = vunpack.c.l.b16 %v454
    %v1284 = vunpack.c.h.b16 %v454
    %v1285 = vunpack.c.l.b16 %v455
    %v1286 = vunpack.c.h.b16 %v455
    %v1287 = vunpack.c.l.b16 %v456
    %v1288 = vunpack.c.h.b16 %v456
    %v1289 = vunpack.c.l.b16 %v457
    %v1290 = vunpack.c.h.b16 %v457
    %v1291 = vunpack.c.l.b16 %v458
    %v1292 = vunpack.c.h.b16 %v458
    %v1293 = vunpack.c.l.b16 %v459
    %v1294 = vunpack.c.h.b16 %v459
    %v1295 = vunpack.c.l.b16 %v460
    %v1296 = vunpack.c.h.b16 %v460
    %v1297 = vunpack.c.l.b16 %v461
    %v1298 = vunpack.c.h.b16 %v461
    %v1299 = vunpack.c.l.b16 %v462
    %v1300 = vunpack.c.h.b16 %v462
    %v1301 = vunpack.c.l.b16 %v463
    %v1302 = vunpack.c.h.b16 %v463
    %v1303 = vunpack.c.l.b16 %v464
    %v1304 = vunpack.c.h.b16 %v464
    %v1305 = vunpack.c.l.b16 %v465
    %v1306 = vunpack.c.h.b16 %v465
    %v1307 = vunpack.c.l.b16 %v466
    %v1308 = vunpack.c.h.b16 %v466
    %v1309 = vunpack.c.l.b16 %v467
    %v1310 = vunpack.c.h.b16 %v467
    %v1311 = vunpack.c.l.b16 %v468
    %v1312 = vunpack.c.h.b16 %v468
    %v1313 = vunpack.c.l.b16 %v469
    %v1314 = vunpack.c.h.b16 %v469
    %v1315 = vunpack.c.l.b16 %v470
    %v1316 = vunpack.c.h.b16 %v470
    %v1317 = vunpack.c.l.b16 %v471
    %v1318 = vunpack.c.h.b16 %v471
    %v1319 = vunpack.c.l.b16 %v472
    %v1320 = vunpack.c.h.b16 %v472
    %v1321 = vunpack.c.l.b16 %v473
    %v1322 = vunpack.c.h.b16 %v473
    %v1323 = vunpack.c.l.b16 %v474
    %v1324 = vunpack.c.h.b16 %v474
    %v1325 = vunpack.c.l.b16 %v475
    %v1326 = vunpack.c.h.b16 %v475
    %v1327 = vunpack.c.l.b16 %v476
    %v1328 = vunpack.c.h.b16 %v476
    %v1329 = vunpack.c.l.b16 %v477
    %v1330 = vunpack.c.h.b16 %v477
    %v1331 = vunpack.c.l.b16 %v478
    %v1332 = vunpack.c.h.b16 %v478
    %v1333 = vunpack.c.l.b16 %v479
    %v1334 = vunpack.c.h.b16 %v479
    %v1335 = vunpack.c.l.b16 %v480
    %v1336 = vunpack.c.h.b16 %v480
    %v1337 = vunpack.c.l.b16 %v481
    %v1338 = vunpack.c.h.b16 %v481
    %v1339 = vunpack.c.l.b16 %v482
    %v1340 = vunpack.c.h.b16 %v482
    %v1341 = vunpack.c.l.b16 %v483
    %v1342 = vunpack.c.h.b16 %v483
    %v1343 = vunpack.c.l.b16 %v484
    %v1344 = vunpack.c.h.b16 %v484
    %v1345 = vunpack.c.l.b16 %v485
    %v1346 = vunpack.c.h.b16 %v485
    %v1347 = vunpack.c.l.b16 %v486
    %v1348 = vunpack.c.h.b16 %v486
    %v1349 = vunpack.c.l.b16 %v487
    %v1350 = vunpack.c.h.b16 %v487
    %v1351 = vunpack.c.l.b16 %v488
    %v1352 = vunpack.c.h.b16 %v488
    %v1353 = vunpack.c.l.b16 %v489
    %v1354 = vunpack.c.h.b16 %v489
    %v1355 = vunpack.c.l.b16 %v490
    %v1356 = vunpack.c.h.b16 %v490
    %v1357 = vunpack.c.l.b16 %v491
    %v1358 = vunpack.c.h.b16 %v491
    %v1359 = vunpack.c.l.b16 %v492
    %v1360 = vunpack.c.h.b16 %v492
    %v1361 = vunpack.c.l.b16 %v493
    %v1362 = vunpack.c.h.b16 %v493
    %v1363 = vunpack.c.l.b16 %v494
    %v1364 = vunpack.c.h.b16 %v494
    %v1365 = vunpack.c.l.b16 %v495
    %v1366 = vunpack.c.h.b16 %v495
    %v1367 = vunpack.c.l.b16 %v496
    %v1368 = vunpack.c.h.b16 %v496
    %v1369 = vunpack.c.l.b16 %v497
    %v1370 = vunpack.c.h.b16 %v497
    %v1371 = vunpack.c.l.b16 %v498
    %v1372 = vunpack.c.h.b16 %v498
    %v1373 = vunpack.c.l.b16 %v499
    %v1374 = vunpack.c.h.b16 %v499
    %v1375 = vunpack.c.l.b16 %v500
    %v1376 = vunpack.c.h.b16 %v500
    %v1377 = vunpack.c.l.b16 %v501
    %v1378 = vunpack.c.h.b16 %v501
    %v1379 = vunpack.c.l.b16 %v502
    %v1380 = vunpack.c.h.b16 %v502
    %v1381 = vunpack.c.l.b16 %v503
    %v1382 = vunpack.c.h.b16 %v503
    %v1383 = vunpack.c.l.b16 %v504
    %v1384 = vunpack.c.h.b16 %v504
    %v1385 = vunpack.c.l.b16 %v505
    %v1386 = vunpack.c.h.b16 %v505
    %v1387 = vunpack.c.l.b16 %v506
    %v1388 = vunpack.c.h.b16 %v506
    %v1389 = vunpack.c.l.b16 %v507
    %v1390 = vunpack.c.h.b16 %v507
    %v1391 = vunpack.c.l.b16 %v508
    %v1392 = vunpack.c.h.b16 %v508
    %v1393 = vunpack.c.l.b16 %v509
    %v1394 = vunpack.c.h.b16 %v509
    %v1395 = vunpack.c.l.b16 %v510
    %v1396 = vunpack.c.h.b16 %v510
    %v1397 = vunpack.c.l.b16 %v511
    %v1398 = vunpack.c.h.b16 %v511
    %v1399 = vunpack.c.l.b16 %v512
    %v1400 = vunpack.c.h.b16 %v512
    %v1401 = vunpack.c.l.b16 %v513
    %v1402 = vunpack.c.h.b16 %v513
    %v1403 = vunpack.c.l.b16 %v514
    %v1404 = vunpack.c.h.b16 %v514
    %v1405 = vunpack.c.l.b16 %v515
    %v1406 = vunpack.c.h.b16 %v515
    %v1407 = vunpack.c.l.b16 %v516
    %v1408 = vunpack.c.h.b16 %v516
    %v1409 = vunpack.c.l.b16 %v517
    %v1410 = vunpack.c.h.b16 %v517
    %v1411 = vunpack.c.l.b16 %v518
    %v1412 = vunpack.c.h.b16 %v518
    %v1413 = vunpack.c.l.b16 %v519
    %v1414 = vunpack.c.h.b16 %v519
    %v1415 = vunpack.c.l.b16 %v520
    %v1416 = vunpack.c.h.b16 %v520
    %v1417 = vunpack.c.l.b16 %v521
    %v1418 = vunpack.c.h.b16 %v521
    %v1419 = vunpack.c.l.b16 %v522
    %v1420 = vunpack.c.h.b16 %v522
    %v1421 = vunpack.c.l.b16 %v523
    %v1422 = vunpack.c.h.b16 %v523
    %v1423 = vunpack.c.l.b16 %v524
    %v1424 = vunpack.c.h.b16 %v524
    %v1425 = vunpack.c.l.b16 %v525
    %v1426 = vunpack.c.h.b16 %v525
    %v1427 = vunpack.c.l.b16 %v526
    %v1428 = vunpack.c.h.b16 %v526
    %v1429 = vunpack.c.l.b16 %v527
    %v1430 = vunpack.c.h.b16 %v527
    %v1431 = vunpack.c.l.b16 %v528
    %v1432 = vunpack.c.h.b16 %v528
    %v1433 = vunpack.c.l.b16 %v529
    %v1434 = vunpack.c.h.b16 %v529
    %v1435 = vunpack.c.l.b16 %v530
    %v1436 = vunpack.c.h.b16 %v530
    %v1437 = vunpack.c.l.b16 %v531
    %v1438 = vunpack.c.h.b16 %v531
    %v1439 = vunpack.c.l.b16 %v532
    %v1440 = vunpack.c.h.b16 %v532
    %v1441 = vunpack.c.l.b16 %v533
    %v1442 = vunpack.c.h.b16 %v533
    %v1443 = vunpack.c.l.b16 %v534
    %v1444 = vunpack.c.h.b16 %v534
    %v1445 = vunpack.c.l.b16 %v535
    %v1446 = vunpack.c.h.b16 %v535
    %v1447 = vunpack.c.l.b16 %v536
    %v1448 = vunpack.c.h.b16 %v536
    %v1449 = vunpack.c.l.b16 %v537
    %v1450 = vunpack.c.h.b16 %v537
    %v1451 = vunpack.c.l.b16 %v538
    %v1452 = vunpack.c.h.b16 %v538
    %v1453 = vunpack.c.l.b16 %v539
    %v1454 = vunpack.c.h.b16 %v539
    %v1455 = vunpack.c.l.b16 %v540
    %v1456 = vunpack.c.h.b16 %v540
    %v1457 = vunpack.c.l.b16 %v541
    %v1458 = vunpack.c.h.b16 %v541
    %v1459 = vunpack.c.l.b16 %v542
    %v1460 = vunpack.c.h.b16 %v542
    %v1461 = vunpack.c.l.b16 %v543
    %v1462 = vunpack.c.h.b16 %v543
    %v1463 = vunpack.c.l.b16 %v544
    %v1464 = vunpack.c.h.b16 %v544
    %v1465 = vunpack.c.l.b16 %v545
    %v1466 = vunpack.c.h.b16 %v545
    %v1467 = vunpack.c.l.b16 %v546
    %v1468 = vunpack.c.h.b16 %v546
    %v1469 = vunpack.c.l.b16 %v547
    %v1470 = vunpack.c.h.b16 %v547
    %v1471 = vunpack.c.l.b16 %v548
    %v1472 = vunpack.c.h.b16 %v548
    %v1473 = vunpack.c.l.b16 %v549
    %v1474 = vunpack.c.h.b16 %v549
    %v1475 = vunpack.c.l.b16 %v550
    %v1476 = vunpack.c.h.b16 %v550
    %v1477 = vunpack.c.l.b16 %v551
    %v1478 = vunpack.c.h.b16 %v551
    %v1479 = vunpack.c.l.b16 %v552
    %v1480 = vunpack.c.h.b16 %v552
    %v1481 = vunpack.c.l.b16 %v553
    %v1482 = vunpack.c.h.b16 %v553
    %v1483 = vunpack.c.l.b16 %v554
    %v1484 = vunpack.c.h.b16 %v554
    %v1485 = vunpack.c.l.b16 %v555
    %v1486 = vunpack.c.h.b16 %v555
    %v1487 = vunpack.c.l.b16 %v556
    %v1488 = vunpack.c.h.b16 %v556
    %v1489 = vunpack.c.l.b16 %v557
    %v1490 = vunpack.c.h.b16 %v557
    %v1491 = vunpack.c.l.b16 %v558
    %v1492 = vunpack.c.h.b16 %v558
    %v1493 = vunpack.c.l.b16 %v559
    %v1494 = vunpack.c.h.b16 %v559
    %v1495 = vunpack.c.l.b16 %v560
    %v1496 = vunpack.c.h.b16 %v560
    %v1497 = vunpack.c.l.b16 %v561
    %v1498 = vunpack.c.h.b16 %v561
    %v1499 = vunpack.c.l.b16 %v562
    %v1500 = vunpack.c.h.b16 %v562
    %v1501 = vunpack.c.l.b16 %v563
    %v1502 = vunpack.c.h.b16 %v563
    %v1503 = vunpack.c.l.b16 %v564
    %v1504 = vunpack.c.h.b16 %v564
    %v1505 = vunpack.c.l.b16 %v565
    %v1506 = vunpack.c.h.b16 %v565
    %v1507 = vunpack.c.l.b16 %v566
    %v1508 = vunpack.c.h.b16 %v566
    %v1509 = vunpack.c.l.b16 %v567
    %v1510 = vunpack.c.h.b16 %v567
    %v1511 = vunpack.c.l.b16 %v568
    %v1512 = vunpack.c.h.b16 %v568
    %v1513 = vunpack.c.l.b16 %v569
    %v1514 = vunpack.c.h.b16 %v569
    %v1515 = vunpack.c.l.b16 %v570
    %v1516 = vunpack.c.h.b16 %v570
    %v1517 = vunpack.c.l.b16 %v571
    %v1518 = vunpack.c.h.b16 %v571
    %v1519 = vunpack.c.l.b16 %v572
    %v1520 = vunpack.c.h.b16 %v572
    %v1521 = vunpack.c.l.b16 %v573
    %v1522 = vunpack.c.h.b16 %v573
    %v1523 = vunpack.c.l.b16 %v574
    %v1524 = vunpack.c.h.b16 %v574
    %v1525 = vunpack.c.l.b16 %v575
    %v1526 = vunpack.c.h.b16 %v575
    %v1527 = vunpack.c.l.b16 %v576
    %v1528 = vunpack.c.h.b16 %v576
    %v1529 = vunpack.c.l.b16 %v577
    %v1530 = vunpack.c.h.b16 %v577
    %v1531 = vunpack.c.l.b16 %v578
    %v1532 = vunpack.c.h.b16 %v578
    %v1533 = vunpack.c.l.b16 %v579
    %v1534 = vunpack.c.h.b16 %v579
    %v1535 = vunpack.c.l.b16 %v580
    %v1536 = vunpack.c.h.b16 %v580
    %v1537 = vunpack.c.l.b16 %v581
    %v1538 = vunpack.c.h.b16 %v581
    %v1539 = vunpack.c.l.b16 %v582
    %v1540 = vunpack.c.h.b16 %v582
    %v1541 = vunpack.c.l.b16 %v583
    %v1542 = vunpack.c.h.b16 %v583
    %v1543 = vunpack.c.l.b16 %v584
    %v1544 = vunpack.c.h.b16 %v584
    %v1545 = vunpack.c.l.b16 %v585
    %v1546 = vunpack.c.h.b16 %v585
    %v1547 = vunpack.c.l.b16 %v586
    %v1548 = vunpack.c.h.b16 %v586
    %v1549 = vunpack.c.l.b16 %v587
    %v1550 = vunpack.c.h.b16 %v587
    %v1551 = vunpack.c.l.b16 %v588
    %v1552 = vunpack.c.h.b16 %v588
    %v1553 = vunpack.c.l.b16 %v589
    %v1554 = vunpack.c.h.b16 %v589
    %v1555 = vunpack.c.l.b16 %v590
    %v1556 = vunpack.c.h.b16 %v590
    %v1557 = vunpack.c.l.b16 %v591
    %v1558 = vunpack.c.h.b16 %v591
    %v1559 = vunpack.c.l.b16 %v592
    %v1560 = vunpack.c.h.b16 %v592
    %v1561 = vunpack.c.l.b16 %v593
    %v1562 = vunpack.c.h.b16 %v593
    %v1563 = vunpack.c.l.b16 %v594
    %v1564 = vunpack.c.h.b16 %v594
    %v1565 = vunpack.c.l.b16 %v595
    %v1566 = vunpack.c.h.b16 %v595
    %v1567 = vunpack.c.l.b16 %v596
    %v1568 = vunpack.c.h.b16 %v596
    %v1569 = vunpack.c.l.b16 %v597
    %v1570 = vunpack.c.h.b16 %v597
    %v1571 = vunpack.c.l.b16 %v598
    %v1572 = vunpack.c.h.b16 %v598
    %v1573 = vunpack.c.l.b16 %v599
    %v1574 = vunpack.c.h.b16 %v599
    %v1575 = vunpack.c.l.b16 %v600
    %v1576 = vunpack.c.h.b16 %v600
    %v1577 = vunpack.c.l.b16 %v601
    %v1578 = vunpack.c.h.b16 %v601
    %v1579 = vunpack.c.l.b16 %v602
    %v1580 = vunpack.c.h.b16 %v602
    %v1581 = vunpack.c.l.b16 %v603
    %v1582 = vunpack.c.h.b16 %v603
    %v1583 = vunpack.c.l.b16 %v604
    %v1584 = vunpack.c.h.b16 %v604
    %v1585 = vunpack.c.l.b16 %v605
    %v1586 = vunpack.c.h.b16 %v605
    %v1587 = vunpack.c.l.b16 %v606
    %v1588 = vunpack.c.h.b16 %v606
    %v1589 = vunpack.c.l.b16 %v607
    %v1590 = vunpack.c.h.b16 %v607
    %v1591 = vunpack.c.l.b16 %v608
    %v1592 = vunpack.c.h.b16 %v608
    %v1593 = vunpack.c.l.b16 %v609
    %v1594 = vunpack.c.h.b16 %v609
    %v1595 = vunpack.c.l.b16 %v610
    %v1596 = vunpack.c.h.b16 %v610
    %v1597 = vunpack.c.l.b16 %v611
    %v1598 = vunpack.c.h.b16 %v611
    %v1599 = vunpack.c.l.b16 %v612
    %v1600 = vunpack.c.h.b16 %v612
    %v1601 = vunpack.c.l.b16 %v613
    %v1602 = vunpack.c.h.b16 %v613
    %v1603 = vunpack.c.l.b16 %v614
    %v1604 = vunpack.c.h.b16 %v614
    %v1605 = vunpack.c.l.b16 %v615
    %v1606 = vunpack.c.h.b16 %v615
    %v1607 = vunpack.c.l.b16 %v616
    %v1608 = vunpack.c.h.b16 %v616
    %v1609 = vunpack.c.l.b16 %v617
    %v1610 = vunpack.c.h.b16 %v617
    %v1611 = vunpack.c.l.b16 %v618
    %v1612 = vunpack.c.h.b16 %v618
    %v1613 = vunpack.c.l.b16 %v619
    %v1614 = vunpack.c.h.b16 %v619
    %v1615 = vunpack.c.l.b16 %v620
    %v1616 = vunpack.c.h.b16 %v620
    %v1617 = vunpack.c.l.b16 %v621
    %v1618 = vunpack.c.h.b16 %v621
    %v1619 = vunpack.c.l.b16 %v622
    %v1620 = vunpack.c.h.b16 %v622
    %v1621 = vunpack.c.l.b16 %v623
    %v1622 = vunpack.c.h.b16 %v623
    %v1623 = vunpack.c.l.b16 %v624
    %v1624 = vunpack.c.h.b16 %v624
    %v1625 = vunpack.c.l.b16 %v625
    %v1626 = vunpack.c.h.b16 %v625
    %v1627 = vunpack.c.l.b16 %v626
    %v1628 = vunpack.c.h.b16 %v626
    %v1629 = vunpack.c.l.b16 %v627
    %v1630 = vunpack.c.h.b16 %v627
    %v1631 = vunpack.c.l.b16 %v628
    %v1632 = vunpack.c.h.b16 %v628
    %v1633 = vunpack.c.l.b16 %v629
    %v1634 = vunpack.c.h.b16 %v629
    %v1635 = vunpack.c.l.b16 %v630
    %v1636 = vunpack.c.h.b16 %v630
    %v1637 = vunpack.c.l.b16 %v631
    %v1638 = vunpack.c.h.b16 %v631
    %v1639 = vunpack.c.l.b16 %v632
    %v1640 = vunpack.c.h.b16 %v632
    %v1641 = vunpack.c.l.b16 %v633
    %v1642 = vunpack.c.h.b16 %v633
    %v1643 = vunpack.c.l.b16 %v634
    %v1644 = vunpack.c.h.b16 %v634
    %v1645 = vunpack.c.l.b16 %v635
    %v1646 = vunpack.c.h.b16 %v635
    %v1647 = vunpack.c.l.b16 %v636
    %v1648 = vunpack.c.h.b16 %v636
    %v1649 = vunpack.c.l.b16 %v637
    %v1650 = vunpack.c.h.b16 %v637
    %v1651 = vunpack.c.l.b16 %v638
    %v1652 = vunpack.c.h.b16 %v638
    %v1653 = vunpack.c.l.b16 %v639
    %v1654 = vunpack.c.h.b16 %v639
    %v1655 = vunpack.c.l.b16 %v640
    %v1656 = vunpack.c.h.b16 %v640
    %v1657 = vunpack.c.l.b16 %v641
    %v1658 = vunpack.c.h.b16 %v641
    %v1659 = vunpack.c.l.b16 %v642
    %v1660 = vunpack.c.h.b16 %v642
    %v1661 = vpack.c.b16 %v1023, %v1021
    %v1662 = vpack.c.b16 %v1024, %v1022
    %v1663 = vpack.c.b16 %v1027, %v1025
    %v1664 = vpack.c.b16 %v1028, %v1026
    %v1665 = vpack.c.b16 %v1031, %v1029
    %v1666 = vpack.c.b16 %v1032, %v1030
    %v1667 = vpack.c.b16 %v1035, %v1033
    %v1668 = vpack.c.b16 %v1036, %v1034
    %v1669 = vpack.c.b16 %v1039, %v1037
    %v1670 = vpack.c.b16 %v1040, %v1038
    %v1671 = vpack.c.b16 %v1043, %v1041
    %v1672 = vpack.c.b16 %v1044, %v1042
    %v1673 = vpack.c.b16 %v1047, %v1045
    %v1674 = vpack.c.b16 %v1048, %v1046
    %v1675 = vpack.c.b16 %v1051, %v1049
    %v1676 = vpack.c.b16 %v1052, %v1050
    %v1677 = vpack.c.b16 %v1055, %v1053
    %v1678 = vpack.c.b16 %v1056, %v1054
    %v1679 = vpack.c.b16 %v1059, %v1057
    %v1680 = vpack.c.b16 %v1060, %v1058
    %v1681 = vpack.c.b16 %v1063, %v1061
    %v1682 = vpack.c.b16 %v1064, %v1062
    %v1683 = vpack.c.b16 %v1067, %v1065
    %v1684 = vpack.c.b16 %v1068, %v1066
    %v1685 = vpack.c.b16 %v1071, %v1069
    %v1686 = vpack.c.b16 %v1072, %v1070
    %v1687 = vpack.c.b16 %v1075, %v1073
    %v1688 = vpack.c.b16 %v1076, %v1074
    %v1689 = vpack.c.b16 %v1079, %v1077
    %v1690 = vpack.c.b16 %v1080, %v1078
    %v1691 = vpack.c.b16 %v1083, %v1081
    %v1692 = vpack.c.b16 %v1084, %v1082
    %v1693 = vpack.c.b16 %v1087, %v1085
    %v1694 = vpack.c.b16 %v1088, %v1086
    %v1695 = vpack.c.b16 %v1091, %v1089
    %v1696 = vpack.c.b16 %v1092, %v1090
    %v1697 = vpack.c.b16 %v1095, %v1093
    %v1698 = vpack.c.b16 %v1096, %v1094
    %v1699 = vpack.c.b16 %v1099, %v1097
    %v1700 = vpack.c.b16 %v1100, %v1098
    %v1701 = vpack.c.b16 %v1103, %v1101
    %v1702 = vpack.c.b16 %v1104, %v1102
    %v1703 = vpack.c.b16 %v1107, %v1105
    %v1704 = vpack.c.b16 %v1108, %v1106
    %v1705 = vpack.c.b16 %v1111, %v1109
    %v1706 = vpack.c.b16 %v1112, %v1110
    %v1707 = vpack.c.b16 %v1115, %v1113
    %v1708 = vpack.c.b16 %v1116, %v1114
    %v1709 = vpack.c.b16 %v1119, %v1117
    %v1710 = vpack.c.b16 %v1120, %v1118
    %v1711 = vpack.c.b16 %v1123, %v1121
    %v1712 = vpack.c.b16 %v1124, %v1122
    %v1713 = vpack.c.b16 %v1127, %v1125
    %v1714 = vpack.c.b16 %v1128, %v1126
    %v1715 = vpack.c.b16 %v1131, %v1129
    %v1716 = vpack.c.b16 %v1132, %v1130
    %v1717 = vpack.c.b16 %v1135, %v1133
    %v1718 = vpack.c.b16 %v1136, %v1134
    %v1719 = vpack.c.b16 %v1139, %v1137
    %v1720 = vpack.c.b16 %v1140, %v1138
    %v1721 = vpack.c.b16 %v1143, %v1141
    %v1722 = vpack.c.b16 %v1144, %v1142
    %v1723 = vpack.c.b16 %v1147, %v1145
    %v1724 = vpack.c.b16 %v1148, %v1146
    %v1725 = vpack.c.b16 %v1151, %v1149
    %v1726 = vpack.c.b16 %v1152, %v1150
    %v1727 = vpack.c.b16 %v1155, %v1153
    %v1728 = vpack.c.b16 %v1156, %v1154
    %v1729 = vpack.c.b16 %v1159, %v1157
    %v1730 = vpack.c.b16 %v1160, %v1158
    %v1731 = vpack.c.b16 %v1163, %v1161
    %v1732 = vpack.c.b16 %v1164, %v1162
    %v1733 = vpack.c.b16 %v1167, %v1165
    %v1734 = vpack.c.b16 %v1168, %v1166
    %v1735 = vpack.c.b16 %v1171, %v1169
    %v1736 = vpack.c.b16 %v1172, %v1170
    %v1737 = vpack.c.b16 %v1175, %v1173
    %v1738 = vpack.c.b16 %v1176, %v1174
    %v1739 = vpack.c.b16 %v1179, %v1177
    %v1740 = vpack.c.b16 %v1180, %v1178
    %v1741 = vpack.c.b16 %v1183, %v1181
    %v1742 = vpack.c.b16 %v1184, %v1182
    %v1743 = vpack.c.b16 %v1187, %v1185
    %v1744 = vpack.c.b16 %v1188, %v1186
    %v1745 = vpack.c.b16 %v1191, %v1189
    %v1746 = vpack.c.b16 %v1192, %v1190
    %v1747 = vpack.c.b16 %v1195, %v1193
    %v1748 = vpack.c.b16 %v1196, %v1194
    %v1749 = vpack.c.b16 %v1199, %v1197
    %v1750 = vpack.c.b16 %v1200, %v1198
    %v1751 = vpack.c.b16 %v1203, %v1201
    %v1752 = vpack.c.b16 %v1204, %v1202
    %v1753 = vpack.c.b16 %v1207, %v1205
    %v1754 = vpack.c.b16 %v1208, %v1206
    %v1755 = vpack.c.b16 %v1211, %v1209
    %v1756 = vpack.c.b16 %v1212, %v1210
    %v1757 = vpack.c.b16 %v1215, %v1213
    %v1758 = vpack.c.b16 %v1216, %v1214
    %v1759 = vpack.c.b16 %v1219, %v1217
    %v1760 = vpack.c.b16 %v1220, %v1218
    %v1761 = vpack.c.b16 %v1223, %v1221
    %v1762 = vpack.c.b16 %v1224, %v1222
    %v1763 = vpack.c.b16 %v1227, %v1225
    %v1764 = vpack.c.b16 %v1228, %v1226
    %v1765 = vpack.c.b16 %v1231, %v1229
    %v1766 = vpack.c.b16 %v1232, %v1230
    %v1767 = vpack.c.b16 %v1235, %v1233
    %v1768 = vpack.c.b16 %v1236, %v1234
    %v1769 = vpack.c.b16 %v1239, %v1237
    %v1770 = vpack.c.b16 %v1240, %v1238
    %v1771 = vpack.c.b16 %v1243, %v1241
    %v1772 = vpack.c.b16 %v1244, %v1242
    %v1773 = vpack.c.b16 %v1247, %v1245
    %v1774 = vpack.c.b16 %v1248, %v1246
    %v1775 = vpack.c.b16 %v1251, %v1249
    %v1776 = vpack.c.b16 %v1252, %v1250
    %v1777 = vpack.c.b16 %v1255, %v1253
    %v1778 = vpack.c.b16 %v1256, %v1254
    %v1779 = vpack.c.b16 %v1259, %v1257
    %v1780 = vpack.c.b16 %v1260, %v1258
    %v1781 = vpack.c.b16 %v1263, %v1261
    %v1782 = vpack.c.b16 %v1264, %v1262
    %v1783 = vpack.c.b16 %v1267, %v1265
    %v1784 = vpack.c.b16 %v1268, %v1266
    %v1785 = vpack.c.b16 %v1271, %v1269
    %v1786 = vpack.c.b16 %v1272, %v1270
    %v1787 = vpack.c.b16 %v1275, %v1273
    %v1788 = vpack.c.b16 %v1276, %v1274
    %v1789 = vpack.c.b16 %v1279, %v1277
    %v1790 = vpack.c.b16 %v1280, %v1278
    %v1791 = vpack.c.b16 %v1283, %v1281
    %v1792 = vpack.c.b16 %v1284, %v1282
    %v1793 = vpack.c.b16 %v1287, %v1285
    %v1794 = vpack.c.b16 %v1288, %v1286
    %v1795 = vpack.c.b16 %v1291, %v1289
    %v1796 = vpack.c.b16 %v1292, %v1290
    %v1797 = vpack.c.b16 %v1295, %v1293
    %v1798 = vpack.c.b16 %v1296, %v1294
    %v1799 = vpack.c.b16 %v1299, %v1297
    %v1800 = vpack.c.b16 %v1300, %v1298
    %v1801 = vpack.c.b16 %v1303, %v1301
    %v1802 = vpack.c.b16 %v1304, %v1302
    %v1803 = vpack.c.b16 %v1307, %v1305
    %v1804 = vpack.c.b16 %v1308, %v1306
    %v1805 = vpack.c.b16 %v1311, %v1309
    %v1806 = vpack.c.b16 %v1312, %v1310
    %v1807 = vpack.c.b16 %v1315, %v1313
    %v1808 = vpack.c.b16 %v1316, %v1314
    %v1809 = vpack.c.b16 %v1319, %v1317
    %v1810 = vpack.c.b16 %v1320, %v1318
    %v1811 = vpack.c.b16 %v1323, %v1321
    %v1812 = vpack.c.b16 %v1324, %v1322
    %v1813 = vpack.c.b16 %v1327, %v1325
    %v1814 = vpack.c.b16 %v1328, %v1326
    %v1815 = vpack.c.b16 %v1331, %v1329
    %v1816 = vpack.c.b16 %v1332, %v1330
    %v1817 = vpack.c.b16 %v1335, %v1333
    %v1818 = vpack.c.b16 %v1336, %v1334
    %v1819 = vpack.c.b16 %v1339, %v1337
    %v1820 = vpack.c.b16 %v1340, %v1338
    %v1821 = vpack.c.b16 %v1343, %v1341
    %v1822 = vpack.c.b16 %v1344, %v1342
    %v1823 = vpack.c.b16 %v1347, %v1345
    %v1824 = vpack.c.b16 %v1348, %v1346
    %v1825 = vpack.c.b16 %v1351, %v1349
    %v1826 = vpack.c.b16 %v1352, %v1350
    %v1827 = vpack.c.b16 %v1355, %v1353
    %v1828 = vpack.c.b16 %v1356, %v1354
    %v1829 = vpack.c.b16 %v1359, %v1357
    %v1830 = vpack.c.b16 %v1360, %v1358
    %v1831 = vpack.c.b16 %v1363, %v1361
    %v1832 = vpack.c.b16 %v1364, %v1362
    %v1833 = vpack.c.b16 %v1367, %v1365
    %v1834 = vpack.c.b16 %v1368, %v1366
    %v1835 = vpack.c.b16 %v1371, %v1369
    %v1836 = vpack.c.b16 %v1372, %v1370
    %v1837 = vpack.c.b16 %v1375, %v1373
    %v1838 = vpack.c.b16 %v1376, %v1374
    %v1839 = vpack.c.b16 %v1379, %v1377
    %v1840 = vpack.c.b16 %v1380, %v1378
    %v1841 = vpack.c.b16 %v1383, %v1381
    %v1842 = vpack.c.b16 %v1384, %v1382
    %v1843 = vpack.c.b16 %v1387, %v1385
    %v1844 = vpack.c.b16 %v1388, %v1386
    %v1845 = vpack.c.b16 %v1391, %v1389
    %v1846 = vpack.c.b16 %v1392, %v1390
    %v1847 = vpack.c.b16 %v1395, %v1393
    %v1848 = vpack.c.b16 %v1396, %v1394
    %v1849 = vpack.c.b16 %v1399, %v1397
    %v1850 = vpack.c.b16 %v1400, %v1398
    %v1851 = vpack.c.b16 %v1403, %v1401
    %v1852 = vpack.c.b16 %v1404, %v1402
    %v1853 = vpack.c.b16 %v1407, %v1405
    %v1854 = vpack.c.b16 %v1408, %v1406
    %v1855 = vpack.c.b16 %v1411, %v1409
    %v1856 = vpack.c.b16 %v1412, %v1410
    %v1857 = vpack.c.b16 %v1415, %v1413
    %v1858 = vpack.c.b16 %v1416, %v1414
    %v1859 = vpack.c.b16 %v1419, %v1417
    %v1860 = vpack.c.b16 %v1420, %v1418
    %v1861 = vpack.c.b16 %v1423, %v1421
    %v1862 = vpack.c.b16 %v1424, %v1422
    %v1863 = vpack.c.b16 %v1427, %v1425
    %v1864 = vpack.c.b16 %v1428, %v1426
    %v1865 = vpack.c.b16 %v1431, %v1429
    %v1866 = vpack.c.b16 %v1432, %v1430
    %v1867 = vpack.c.b16 %v1435, %v1433
    %v1868 = vpack.c.b16 %v1436, %v1434
    %v1869 = vpack.c.b16 %v1439, %v1437
    %v1870 = vpack.c.b16 %v1440, %v1438
    %v1871 = vpack.c.b16 %v1443, %v1441
    %v1872 = vpack.c.b16 %v1444, %v1442
    %v1873 = vpack.c.b16 %v1447, %v1445
    %v1874 = vpack.c.b16 %v1448, %v1446
    %v1875 = vpack.c.b16 %v1451, %v1449
    %v1876 = vpack.c.b16 %v1452, %v1450
    %v1877 = vpack.c.b16 %v1455, %v1453
    %v1878 = vpack.c.b16 %v1456, %v1454
    %v1879 = vpack.c.b16 %v1459, %v1457
    %v1880 = vpack.c.b16 %v1460, %v1458
    %v1881 = vpack.c.b16 %v1463, %v1461
    %v1882 = vpack.c.b16 %v1464, %v1462
    %v1883 = vpack.c.b16 %v1467, %v1465
    %v1884 = vpack.c.b16 %v1468, %v1466
    %v1885 = vpack.c.b16 %v1471, %v1469
    %v1886 = vpack.c.b16 %v1472, %v1470
    %v1887 = vpack.c.b16 %v1475, %v1473
    %v1888 = vpack.c.b16 %v1476, %v1474
    %v1889 = vpack.c.b16 %v1479, %v1477
    %v1890 = vpack.c.b16 %v1480, %v1478
    %v1891 = vpack.c.b16 %v1483, %v1481
    %v1892 = vpack.c.b16 %v1484, %v1482
    %v1893 = vpack.c.b16 %v1487, %v1485
    %v1894 = vpack.c.b16 %v1488, %v1486
    %v1895 = vpack.c.b16 %v1491, %v1489
    %v1896 = vpack.c.b16 %v1492, %v1490
    %v1897 = vpack.c.b16 %v1495, %v1493
    %v1898 = vpack.c.b16 %v1496, %v1494
    %v1899 = vpack.c.b16 %v1499, %v1497
    %v1900 = vpack.c.b16 %v1500, %v1498
    %v1901 = vpack.c.b16 %v1503, %v1501
    %v1902 = vpack.c.b16 %v1504, %v1502
    %v1903 = vpack.c.b16 %v1507, %v1505
    %v1904 = vpack.c.b16 %v1508, %v1506
    %v1905 = vpack.c.b16 %v1511, %v1509
    %v1906 = vpack.c.b16 %v1512, %v1510
    %v1907 = vpack.c.b16 %v1515, %v1513
    %v1908 = vpack.c.b16 %v1516, %v1514
    %v1909 = vpack.c.b16 %v1519, %v1517
    %v1910 = vpack.c.b16 %v1520, %v1518
    %v1911 = vpack.c.b16 %v1523, %v1521
    %v1912 = vpack.c.b16 %v1524, %v1522
    %v1913 = vpack.c.b16 %v1527, %v1525
    %v1914 = vpack.c.b16 %v1528, %v1526
    %v1915 = vpack.c.b16 %v1531, %v1529
    %v1916 = vpack.c.b16 %v1532, %v1530
    %v1917 = vpack.c.b16 %v1535, %v1533
    %v1918 = vpack.c.b16 %v1536, %v1534
    %v1919 = vpack.c.b16 %v1539, %v1537
    %v1920 = vpack.c.b16 %v1540, %v1538
    %v1921 = vpack.c.b16 %v1543, %v1541
    %v1922 = vpack.c.b16 %v1544, %v1542
    %v1923 = vpack.c.b16 %v1547, %v1545
    %v1924 = vpack.c.b16 %v1548, %v1546
    %v1925 = vpack.c.b16 %v1551, %v1549
    %v1926 = vpack.c.b16 %v1552, %v1550
    %v1927 = vpack.c.b16 %v1555, %v1553
    %v1928 = vpack.c.b16 %v1556, %v1554
    %v1929 = vpack.c.b16 %v1559, %v1557
    %v1930 = vpack.c.b16 %v1560, %v1558
    %v1931 = vpack.c.b16 %v1563, %v1561
    %v1932 = vpack.c.b16 %v1564, %v1562
    %v1933 = vpack.c.b16 %v1567, %v1565
    %v1934 = vpack.c.b16 %v1568, %v1566
    %v1935 = vpack.c.b16 %v1571, %v1569
    %v1936 = vpack.c.b16 %v1572, %v1570
    %v1937 = vpack.c.b16 %v1575, %v1573
    %v1938 = vpack.c.b16 %v1576, %v1574
    %v1939 = vpack.c.b16 %v1579, %v1577
    %v1940 = vpack.c.b16 %v1580, %v1578
    %v1941 = vpack.c.b16 %v1583, %v1581
    %v1942 = vpack.c.b16 %v1584, %v1582
    %v1943 = vpack.c.b16 %v1587, %v1585
    %v1944 = vpack.c.b16 %v1588, %v1586
    %v1945 = vpack.c.b16 %v1591, %v1589
    %v1946 = vpack.c.b16 %v1592, %v1590
    %v1947 = vpack.c.b16 %v1595, %v1593
    %v1948 = vpack.c.b16 %v1596, %v1594
    %v1949 = vpack.c.b16 %v1599, %v1597
    %v1950 = vpack.c.b16 %v1600, %v1598
    %v1951 = vpack.c.b16 %v1603, %v1601
    %v1952 = vpack.c.b16 %v1604, %v1602
    %v1953 = vpack.c.b16 %v1607, %v1605
    %v1954 = vpack.c.b16 %v1608, %v1606
    %v1955 = vpack.c.b16 %v1611, %v1609
    %v1956 = vpack.c.b16 %v1612, %v1610
    %v1957 = vpack.c.b16 %v1615, %v1613
    %v1958 = vpack.c.b16 %v1616, %v1614
    %v1959 = vpack.c.b16 %v1619, %v1617
    %v1960 = vpack.c.b16 %v1620, %v1618
    %v1961 = vpack.c.b16 %v1623, %v1621
    %v1962 = vpack.c.b16 %v1624, %v1622
    %v1963 = vpack.c.b16 %v1627, %v1625
    %v1964 = vpack.c.b16 %v1628, %v1626
    %v1965 = vpack.c.b16 %v1631, %v1629
    %v1966 = vpack.c.b16 %v1632, %v1630
    %v1967 = vpack.c.b16 %v1635, %v1633
    %v1968 = vpack.c.b16 %v1636, %v1634
    %v1969 = vpack.c.b16 %v1639, %v1637
    %v1970 = vpack.c.b16 %v1640, %v1638
    %v1971 = vpack.c.b16 %v1643, %v1641
    %v1972 = vpack.c.b16 %v1644, %v1642
    %v1973 = vpack.c.b16 %v1647, %v1645
    %v1974 = vpack.c.b16 %v1648, %v1646
    %v1975 = vpack.c.b16 %v1651, %v1649
    %v1976 = vpack.c.b16 %v1652, %v1650
    %v1977 = vpack.c.b16 %v1655, %v1653
    %v1978 = vpack.c.b16 %v1656, %v1654
    %v1979 = vpack.c.b16 %v1659, %v1657
    %v1980 = vpack.c.b16 %v1660, %v1658
    %2301 = vmatpush.bf16.msra.mxu0 %v1675
    %2302 = vmatpush.bf16.msra.mxu0 %v1673
    %2303 = vmatpush.bf16.msra.mxu0 %v1671
    %2304 = vmatpush.bf16.msra.mxu0 %v1669
    %2305 = vmatpush.bf16.msra.mxu0 %v1667
    %2306 = vmatpush.bf16.msra.mxu0 %v1665
    %2307 = vmatpush.bf16.msra.mxu0 %v1663
    %2308 = vmatpush.bf16.msra.mxu0 %v1661
    %2309 = vmatmul.bf16.gmra.mxu0 %v657
    %v2310 = vpop.f32.mrf.mxu0
    %v2311 = vadd.f32 %v653, %v2310
    %v2312 = vpop.f32.mrf.mxu0
    %2313 = vdwg.mxu0
    %2314 = vmatpush.bf16.msra.mxu0 %v1691
    %2315 = vmatpush.bf16.msra.mxu0 %v1689
    %2316 = vmatpush.bf16.msra.mxu0 %v1687
    %2317 = vmatpush.bf16.msra.mxu0 %v1685
    %2318 = vmatpush.bf16.msra.mxu0 %v1683
    %2319 = vmatpush.bf16.msra.mxu0 %v1681
    %2320 = vmatpush.bf16.msra.mxu0 %v1679
    %2321 = vmatpush.bf16.msra.mxu0 %v1677
    %2322 = vmatmul.bf16.gmra.mxu0 %v658
    %v2323 = vpop.f32.mrf.mxu0
    %v2324 = vadd.f32 %v2311, %v2323
    %v2325 = vpop.f32.mrf.mxu0
    %2326 = vdwg.mxu0
    %2327 = vmatpush.bf16.msra.mxu0 %v1707
    %2328 = vmatpush.bf16.msra.mxu0 %v1705
    %2329 = vmatpush.bf16.msra.mxu0 %v1703
    %2330 = vmatpush.bf16.msra.mxu0 %v1701
    %2331 = vmatpush.bf16.msra.mxu0 %v1699
    %2332 = vmatpush.bf16.msra.mxu0 %v1697
    %2333 = vmatpush.bf16.msra.mxu0 %v1695
    %2334 = vmatpush.bf16.msra.mxu0 %v1693
    %2335 = vmatmul.bf16.gmra.mxu0 %v659
    %v2336 = vpop.f32.mrf.mxu0
    %v2337 = vadd.f32 %v2324, %v2336
    %v2338 = vpop.f32.mrf.mxu0
    %2339 = vdwg.mxu0
    %2340 = vmatpush.bf16.msra.mxu0 %v1723
    %2341 = vmatpush.bf16.msra.mxu0 %v1721
    %2342 = vmatpush.bf16.msra.mxu0 %v1719
    %2343 = vmatpush.bf16.msra.mxu0 %v1717
    %2344 = vmatpush.bf16.msra.mxu0 %v1715
    %2345 = vmatpush.bf16.msra.mxu0 %v1713
    %2346 = vmatpush.bf16.msra.mxu0 %v1711
    %2347 = vmatpush.bf16.msra.mxu0 %v1709
    %2348 = vmatmul.bf16.gmra.mxu0 %v660
    %v2349 = vpop.f32.mrf.mxu0
    %v2350 = vadd.f32 %v2337, %v2349
    %v2351 = vpop.f32.mrf.mxu0
    %2352 = vdwg.mxu0
    %2353 = vmatpush.bf16.msra.mxu0 %v1739
    %2354 = vmatpush.bf16.msra.mxu0 %v1737
    %2355 = vmatpush.bf16.msra.mxu0 %v1735
    %2356 = vmatpush.bf16.msra.mxu0 %v1733
    %2357 = vmatpush.bf16.msra.mxu0 %v1731
    %2358 = vmatpush.bf16.msra.mxu0 %v1729
    %2359 = vmatpush.bf16.msra.mxu0 %v1727
    %2360 = vmatpush.bf16.msra.mxu0 %v1725
    %2361 = vmatmul.bf16.gmra.mxu0 %v661
    %v2362 = vpop.f32.mrf.mxu0
    %v2363 = vadd.f32 %v2350, %v2362
    %v2364 = vpop.f32.mrf.mxu0
    %2365 = vdwg.mxu0
    %2366 = vmatpush.bf16.msra.mxu0 %v1755
    %2367 = vmatpush.bf16.msra.mxu0 %v1753
    %2368 = vmatpush.bf16.msra.mxu0 %v1751
    %2369 = vmatpush.bf16.msra.mxu0 %v1749
    %2370 = vmatpush.bf16.msra.mxu0 %v1747
    %2371 = vmatpush.bf16.msra.mxu0 %v1745
    %2372 = vmatpush.bf16.msra.mxu0 %v1743
    %2373 = vmatpush.bf16.msra.mxu0 %v1741
    %2374 = vmatmul.bf16.gmra.mxu0 %v662
    %v2375 = vpop.f32.mrf.mxu0
    %v2376 = vadd.f32 %v2363, %v2375
    %v2377 = vpop.f32.mrf.mxu0
    %2378 = vdwg.mxu0
    %2379 = vmatpush.bf16.msra.mxu0 %v1771
    %2380 = vmatpush.bf16.msra.mxu0 %v1769
    %2381 = vmatpush.bf16.msra.mxu0 %v1767
    %2382 = vmatpush.bf16.msra.mxu0 %v1765
    %2383 = vmatpush.bf16.msra.mxu0 %v1763
    %2384 = vmatpush.bf16.msra.mxu0 %v1761
    %2385 = vmatpush.bf16.msra.mxu0 %v1759
    %2386 = vmatpush.bf16.msra.mxu0 %v1757
    %2387 = vmatmul.bf16.gmra.mxu0 %v663
    %v2388 = vpop.f32.mrf.mxu0
    %v2389 = vadd.f32 %v2376, %v2388
    %v2390 = vpop.f32.mrf.mxu0
    %2391 = vdwg.mxu0
    %2392 = vmatpush.bf16.msra.mxu0 %v1787
    %2393 = vmatpush.bf16.msra.mxu0 %v1785
    %2394 = vmatpush.bf16.msra.mxu0 %v1783
    %2395 = vmatpush.bf16.msra.mxu0 %v1781
    %2396 = vmatpush.bf16.msra.mxu0 %v1779
    %2397 = vmatpush.bf16.msra.mxu0 %v1777
    %2398 = vmatpush.bf16.msra.mxu0 %v1775
    %2399 = vmatpush.bf16.msra.mxu0 %v1773
    %2400 = vmatmul.bf16.gmra.mxu0 %v664
    %v2401 = vpop.f32.mrf.mxu0
    %v2402 = vadd.f32 %v2389, %v2401
    %v2403 = vpop.f32.mrf.mxu0
    %2404 = vdwg.mxu0
    %2405 = vmatpush.bf16.msra.mxu0 %v1803
    %2406 = vmatpush.bf16.msra.mxu0 %v1801
    %2407 = vmatpush.bf16.msra.mxu0 %v1799
    %2408 = vmatpush.bf16.msra.mxu0 %v1797
    %2409 = vmatpush.bf16.msra.mxu0 %v1795
    %2410 = vmatpush.bf16.msra.mxu0 %v1793
    %2411 = vmatpush.bf16.msra.mxu0 %v1791
    %2412 = vmatpush.bf16.msra.mxu0 %v1789
    %2413 = vmatmul.bf16.gmra.mxu0 %v667
    %v2414 = vpop.f32.mrf.mxu0
    %v2415 = vadd.f32 %v2402, %v2414
    %v2416 = vpop.f32.mrf.mxu0
    %2417 = vdwg.mxu0
    %2418 = vmatpush.bf16.msra.mxu0 %v1819
    %2419 = vmatpush.bf16.msra.mxu0 %v1817
    %2420 = vmatpush.bf16.msra.mxu0 %v1815
    %2421 = vmatpush.bf16.msra.mxu0 %v1813
    %2422 = vmatpush.bf16.msra.mxu0 %v1811
    %2423 = vmatpush.bf16.msra.mxu0 %v1809
    %2424 = vmatpush.bf16.msra.mxu0 %v1807
    %2425 = vmatpush.bf16.msra.mxu0 %v1805
    %2426 = vmatmul.bf16.gmra.mxu0 %v668
    %v2427 = vpop.f32.mrf.mxu0
    %v2428 = vadd.f32 %v2415, %v2427
    %v2429 = vpop.f32.mrf.mxu0
    %2430 = vdwg.mxu0
    %2431 = vmatpush.bf16.msra.mxu0 %v1835
    %2432 = vmatpush.bf16.msra.mxu0 %v1833
    %2433 = vmatpush.bf16.msra.mxu0 %v1831
    %2434 = vmatpush.bf16.msra.mxu0 %v1829
    %2435 = vmatpush.bf16.msra.mxu0 %v1827
    %2436 = vmatpush.bf16.msra.mxu0 %v1825
    %2437 = vmatpush.bf16.msra.mxu0 %v1823
    %2438 = vmatpush.bf16.msra.mxu0 %v1821
    %2439 = vmatmul.bf16.gmra.mxu0 %v669
    %v2440 = vpop.f32.mrf.mxu0
    %v2441 = vadd.f32 %v2428, %v2440
    %v2442 = vpop.f32.mrf.mxu0
    %2443 = vdwg.mxu0
    %2444 = vmatpush.bf16.msra.mxu0 %v1851
    %2445 = vmatpush.bf16.msra.mxu0 %v1849
    %2446 = vmatpush.bf16.msra.mxu0 %v1847
    %2447 = vmatpush.bf16.msra.mxu0 %v1845
    %2448 = vmatpush.bf16.msra.mxu0 %v1843
    %2449 = vmatpush.bf16.msra.mxu0 %v1841
    %2450 = vmatpush.bf16.msra.mxu0 %v1839
    %2451 = vmatpush.bf16.msra.mxu0 %v1837
    %2452 = vmatmul.bf16.gmra.mxu0 %v670
    %v2453 = vpop.f32.mrf.mxu0
    %v2454 = vadd.f32 %v2441, %v2453
    %v2455 = vpop.f32.mrf.mxu0
    %2456 = vdwg.mxu0
    %2457 = vmatpush.bf16.msra.mxu0 %v1867
    %2458 = vmatpush.bf16.msra.mxu0 %v1865
    %2459 = vmatpush.bf16.msra.mxu0 %v1863
    %2460 = vmatpush.bf16.msra.mxu0 %v1861
    %2461 = vmatpush.bf16.msra.mxu0 %v1859
    %2462 = vmatpush.bf16.msra.mxu0 %v1857
    %2463 = vmatpush.bf16.msra.mxu0 %v1855
    %2464 = vmatpush.bf16.msra.mxu0 %v1853
    %2465 = vmatmul.bf16.gmra.mxu0 %v671
    %v2466 = vpop.f32.mrf.mxu0
    %v2467 = vadd.f32 %v2454, %v2466
    %v2468 = vpop.f32.mrf.mxu0
    %2469 = vdwg.mxu0
    %2470 = vmatpush.bf16.msra.mxu0 %v1883
    %2471 = vmatpush.bf16.msra.mxu0 %v1881
    %2472 = vmatpush.bf16.msra.mxu0 %v1879
    %2473 = vmatpush.bf16.msra.mxu0 %v1877
    %2474 = vmatpush.bf16.msra.mxu0 %v1875
    %2475 = vmatpush.bf16.msra.mxu0 %v1873
    %2476 = vmatpush.bf16.msra.mxu0 %v1871
    %2477 = vmatpush.bf16.msra.mxu0 %v1869
    %2478 = vmatmul.bf16.gmra.mxu0 %v672
    %v2479 = vpop.f32.mrf.mxu0
    %v2480 = vadd.f32 %v2467, %v2479
    %v2481 = vpop.f32.mrf.mxu0
    %2482 = vdwg.mxu0
    %2483 = vmatpush.bf16.msra.mxu0 %v1899
    %2484 = vmatpush.bf16.msra.mxu0 %v1897
    %2485 = vmatpush.bf16.msra.mxu0 %v1895
    %2486 = vmatpush.bf16.msra.mxu0 %v1893
    %2487 = vmatpush.bf16.msra.mxu0 %v1891
    %2488 = vmatpush.bf16.msra.mxu0 %v1889
    %2489 = vmatpush.bf16.msra.mxu0 %v1887
    %2490 = vmatpush.bf16.msra.mxu0 %v1885
    %2491 = vmatmul.bf16.gmra.mxu0 %v673
    %v2492 = vpop.f32.mrf.mxu0
    %v2493 = vadd.f32 %v2480, %v2492
    %v2494 = vpop.f32.mrf.mxu0
    %2495 = vdwg.mxu0
    %2496 = vmatpush.bf16.msra.mxu0 %v1915
    %2497 = vmatpush.bf16.msra.mxu0 %v1913
    %2498 = vmatpush.bf16.msra.mxu0 %v1911
    %2499 = vmatpush.bf16.msra.mxu0 %v1909
    %2500 = vmatpush.bf16.msra.mxu0 %v1907
    %2501 = vmatpush.bf16.msra.mxu0 %v1905
    %2502 = vmatpush.bf16.msra.mxu0 %v1903
    %2503 = vmatpush.bf16.msra.mxu0 %v1901
    %2504 = vmatmul.bf16.gmra.mxu0 %v674
    %v2505 = vpop.f32.mrf.mxu0
    %v2506 = vadd.f32 %v2493, %v2505
    %v2507 = vpop.f32.mrf.mxu0
    %2508 = vdwg.mxu0
    %2509 = vmatpush.bf16.msra.mxu0 %v1931
    %2510 = vmatpush.bf16.msra.mxu0 %v1929
    %2511 = vmatpush.bf16.msra.mxu0 %v1927
    %2512 = vmatpush.bf16.msra.mxu0 %v1925
    %2513 = vmatpush.bf16.msra.mxu0 %v1923
    %2514 = vmatpush.bf16.msra.mxu0 %v1921
    %2515 = vmatpush.bf16.msra.mxu0 %v1919
    %2516 = vmatpush.bf16.msra.mxu0 %v1917
    %2517 = vmatmul.bf16.gmra.mxu0 %v677
    %v2518 = vpop.f32.mrf.mxu0
    %v2519 = vadd.f32 %v2506, %v2518
    %v2520 = vpop.f32.mrf.mxu0
    %2521 = vdwg.mxu0
    %2522 = vmatpush.bf16.msra.mxu0 %v1947
    %2523 = vmatpush.bf16.msra.mxu0 %v1945
    %2524 = vmatpush.bf16.msra.mxu0 %v1943
    %2525 = vmatpush.bf16.msra.mxu0 %v1941
    %2526 = vmatpush.bf16.msra.mxu0 %v1939
    %2527 = vmatpush.bf16.msra.mxu0 %v1937
    %2528 = vmatpush.bf16.msra.mxu0 %v1935
    %2529 = vmatpush.bf16.msra.mxu0 %v1933
    %2530 = vmatmul.bf16.gmra.mxu0 %v678
    %v2531 = vpop.f32.mrf.mxu0
    %v2532 = vadd.f32 %v2519, %v2531
    %v2533 = vpop.f32.mrf.mxu0
    %2534 = vdwg.mxu0
    %2535 = vmatpush.bf16.msra.mxu0 %v1963
    %2536 = vmatpush.bf16.msra.mxu0 %v1961
    %2537 = vmatpush.bf16.msra.mxu0 %v1959
    %2538 = vmatpush.bf16.msra.mxu0 %v1957
    %2539 = vmatpush.bf16.msra.mxu0 %v1955
    %2540 = vmatpush.bf16.msra.mxu0 %v1953
    %2541 = vmatpush.bf16.msra.mxu0 %v1951
    %2542 = vmatpush.bf16.msra.mxu0 %v1949
    %2543 = vmatmul.bf16.gmra.mxu0 %v679
    %v2544 = vpop.f32.mrf.mxu0
    %v2545 = vadd.f32 %v2532, %v2544
    %v2546 = vpop.f32.mrf.mxu0
    %2547 = vdwg.mxu0
    %2548 = vmatpush.bf16.msra.mxu0 %v1979
    %2549 = vmatpush.bf16.msra.mxu0 %v1977
    %2550 = vmatpush.bf16.msra.mxu0 %v1975
    %2551 = vmatpush.bf16.msra.mxu0 %v1973
    %2552 = vmatpush.bf16.msra.mxu0 %v1971
    %2553 = vmatpush.bf16.msra.mxu0 %v1969
    %2554 = vmatpush.bf16.msra.mxu0 %v1967
    %2555 = vmatpush.bf16.msra.mxu0 %v1965
    %2556 = vmatmul.bf16.gmra.mxu0 %v680
    %v2557 = vpop.f32.mrf.mxu0
    %v2558 = vadd.f32 %v2545, %v2557
    %v2559 = vpop.f32.mrf.mxu0
    %2560 = vdwg.mxu0
    %2561 = vmatpush.bf16.msra.mxu0 %v1676
    %2562 = vmatpush.bf16.msra.mxu0 %v1674
    %2563 = vmatpush.bf16.msra.mxu0 %v1672
    %2564 = vmatpush.bf16.msra.mxu0 %v1670
    %2565 = vmatpush.bf16.msra.mxu0 %v1668
    %2566 = vmatpush.bf16.msra.mxu0 %v1666
    %2567 = vmatpush.bf16.msra.mxu0 %v1664
    %2568 = vmatpush.bf16.msra.mxu0 %v1662
    %2569 = vmatmul.bf16.gmra.mxu0 %v657
    %v2570 = vpop.f32.mrf.mxu0
    %v2571 = vadd.f32 %v654, %v2570
    %v2572 = vpop.f32.mrf.mxu0
    %2573 = vdwg.mxu0
    %2574 = vmatpush.bf16.msra.mxu0 %v1692
    %2575 = vmatpush.bf16.msra.mxu0 %v1690
    %2576 = vmatpush.bf16.msra.mxu0 %v1688
    %2577 = vmatpush.bf16.msra.mxu0 %v1686
    %2578 = vmatpush.bf16.msra.mxu0 %v1684
    %2579 = vmatpush.bf16.msra.mxu0 %v1682
    %2580 = vmatpush.bf16.msra.mxu0 %v1680
    %2581 = vmatpush.bf16.msra.mxu0 %v1678
    %2582 = vmatmul.bf16.gmra.mxu0 %v658
    %v2583 = vpop.f32.mrf.mxu0
    %v2584 = vadd.f32 %v2571, %v2583
    %v2585 = vpop.f32.mrf.mxu0
    %2586 = vdwg.mxu0
    %2587 = vmatpush.bf16.msra.mxu0 %v1708
    %2588 = vmatpush.bf16.msra.mxu0 %v1706
    %2589 = vmatpush.bf16.msra.mxu0 %v1704
    %2590 = vmatpush.bf16.msra.mxu0 %v1702
    %2591 = vmatpush.bf16.msra.mxu0 %v1700
    %2592 = vmatpush.bf16.msra.mxu0 %v1698
    %2593 = vmatpush.bf16.msra.mxu0 %v1696
    %2594 = vmatpush.bf16.msra.mxu0 %v1694
    %2595 = vmatmul.bf16.gmra.mxu0 %v659
    %v2596 = vpop.f32.mrf.mxu0
    %v2597 = vadd.f32 %v2584, %v2596
    %v2598 = vpop.f32.mrf.mxu0
    %2599 = vdwg.mxu0
    %2600 = vmatpush.bf16.msra.mxu0 %v1724
    %2601 = vmatpush.bf16.msra.mxu0 %v1722
    %2602 = vmatpush.bf16.msra.mxu0 %v1720
    %2603 = vmatpush.bf16.msra.mxu0 %v1718
    %2604 = vmatpush.bf16.msra.mxu0 %v1716
    %2605 = vmatpush.bf16.msra.mxu0 %v1714
    %2606 = vmatpush.bf16.msra.mxu0 %v1712
    %2607 = vmatpush.bf16.msra.mxu0 %v1710
    %2608 = vmatmul.bf16.gmra.mxu0 %v660
    %v2609 = vpop.f32.mrf.mxu0
    %v2610 = vadd.f32 %v2597, %v2609
    %v2611 = vpop.f32.mrf.mxu0
    %2612 = vdwg.mxu0
    %2613 = vmatpush.bf16.msra.mxu0 %v1740
    %2614 = vmatpush.bf16.msra.mxu0 %v1738
    %2615 = vmatpush.bf16.msra.mxu0 %v1736
    %2616 = vmatpush.bf16.msra.mxu0 %v1734
    %2617 = vmatpush.bf16.msra.mxu0 %v1732
    %2618 = vmatpush.bf16.msra.mxu0 %v1730
    %2619 = vmatpush.bf16.msra.mxu0 %v1728
    %2620 = vmatpush.bf16.msra.mxu0 %v1726
    %2621 = vmatmul.bf16.gmra.mxu0 %v661
    %v2622 = vpop.f32.mrf.mxu0
    %v2623 = vadd.f32 %v2610, %v2622
    %v2624 = vpop.f32.mrf.mxu0
    %2625 = vdwg.mxu0
    %2626 = vmatpush.bf16.msra.mxu0 %v1756
    %2627 = vmatpush.bf16.msra.mxu0 %v1754
    %2628 = vmatpush.bf16.msra.mxu0 %v1752
    %2629 = vmatpush.bf16.msra.mxu0 %v1750
    %2630 = vmatpush.bf16.msra.mxu0 %v1748
    %2631 = vmatpush.bf16.msra.mxu0 %v1746
    %2632 = vmatpush.bf16.msra.mxu0 %v1744
    %2633 = vmatpush.bf16.msra.mxu0 %v1742
    %2634 = vmatmul.bf16.gmra.mxu0 %v662
    %v2635 = vpop.f32.mrf.mxu0
    %v2636 = vadd.f32 %v2623, %v2635
    %v2637 = vpop.f32.mrf.mxu0
    %2638 = vdwg.mxu0
    %2639 = vmatpush.bf16.msra.mxu0 %v1772
    %2640 = vmatpush.bf16.msra.mxu0 %v1770
    %2641 = vmatpush.bf16.msra.mxu0 %v1768
    %2642 = vmatpush.bf16.msra.mxu0 %v1766
    %2643 = vmatpush.bf16.msra.mxu0 %v1764
    %2644 = vmatpush.bf16.msra.mxu0 %v1762
    %2645 = vmatpush.bf16.msra.mxu0 %v1760
    %2646 = vmatpush.bf16.msra.mxu0 %v1758
    %2647 = vmatmul.bf16.gmra.mxu0 %v663
    %v2648 = vpop.f32.mrf.mxu0
    %v2649 = vadd.f32 %v2636, %v2648
    %v2650 = vpop.f32.mrf.mxu0
    %2651 = vdwg.mxu0
    %2652 = vmatpush.bf16.msra.mxu0 %v1788
    %2653 = vmatpush.bf16.msra.mxu0 %v1786
    %2654 = vmatpush.bf16.msra.mxu0 %v1784
    %2655 = vmatpush.bf16.msra.mxu0 %v1782
    %2656 = vmatpush.bf16.msra.mxu0 %v1780
    %2657 = vmatpush.bf16.msra.mxu0 %v1778
    %2658 = vmatpush.bf16.msra.mxu0 %v1776
    %2659 = vmatpush.bf16.msra.mxu0 %v1774
    %2660 = vmatmul.bf16.gmra.mxu0 %v664
    %v2661 = vpop.f32.mrf.mxu0
    %v2662 = vadd.f32 %v2649, %v2661
    %v2663 = vpop.f32.mrf.mxu0
    %2664 = vdwg.mxu0
    %2665 = vmatpush.bf16.msra.mxu0 %v1804
    %2666 = vmatpush.bf16.msra.mxu0 %v1802
    %2667 = vmatpush.bf16.msra.mxu0 %v1800
    %2668 = vmatpush.bf16.msra.mxu0 %v1798
    %2669 = vmatpush.bf16.msra.mxu0 %v1796
    %2670 = vmatpush.bf16.msra.mxu0 %v1794
    %2671 = vmatpush.bf16.msra.mxu0 %v1792
    %2672 = vmatpush.bf16.msra.mxu0 %v1790
    %2673 = vmatmul.bf16.gmra.mxu0 %v667
    %v2674 = vpop.f32.mrf.mxu0
    %v2675 = vadd.f32 %v2662, %v2674
    %v2676 = vpop.f32.mrf.mxu0
    %2677 = vdwg.mxu0
    %2678 = vmatpush.bf16.msra.mxu0 %v1820
    %2679 = vmatpush.bf16.msra.mxu0 %v1818
    %2680 = vmatpush.bf16.msra.mxu0 %v1816
    %2681 = vmatpush.bf16.msra.mxu0 %v1814
    %2682 = vmatpush.bf16.msra.mxu0 %v1812
    %2683 = vmatpush.bf16.msra.mxu0 %v1810
    %2684 = vmatpush.bf16.msra.mxu0 %v1808
    %2685 = vmatpush.bf16.msra.mxu0 %v1806
    %2686 = vmatmul.bf16.gmra.mxu0 %v668
    %v2687 = vpop.f32.mrf.mxu0
    %v2688 = vadd.f32 %v2675, %v2687
    %v2689 = vpop.f32.mrf.mxu0
    %2690 = vdwg.mxu0
    %2691 = vmatpush.bf16.msra.mxu0 %v1836
    %2692 = vmatpush.bf16.msra.mxu0 %v1834
    %2693 = vmatpush.bf16.msra.mxu0 %v1832
    %2694 = vmatpush.bf16.msra.mxu0 %v1830
    %2695 = vmatpush.bf16.msra.mxu0 %v1828
    %2696 = vmatpush.bf16.msra.mxu0 %v1826
    %2697 = vmatpush.bf16.msra.mxu0 %v1824
    %2698 = vmatpush.bf16.msra.mxu0 %v1822
    %2699 = vmatmul.bf16.gmra.mxu0 %v669
    %v2700 = vpop.f32.mrf.mxu0
    %v2701 = vadd.f32 %v2688, %v2700
    %v2702 = vpop.f32.mrf.mxu0
    %2703 = vdwg.mxu0
    %2704 = vmatpush.bf16.msra.mxu0 %v1852
    %2705 = vmatpush.bf16.msra.mxu0 %v1850
    %2706 = vmatpush.bf16.msra.mxu0 %v1848
    %2707 = vmatpush.bf16.msra.mxu0 %v1846
    %2708 = vmatpush.bf16.msra.mxu0 %v1844
    %2709 = vmatpush.bf16.msra.mxu0 %v1842
    %2710 = vmatpush.bf16.msra.mxu0 %v1840
    %2711 = vmatpush.bf16.msra.mxu0 %v1838
    %2712 = vmatmul.bf16.gmra.mxu0 %v670
    %v2713 = vpop.f32.mrf.mxu0
    %v2714 = vadd.f32 %v2701, %v2713
    %v2715 = vpop.f32.mrf.mxu0
    %2716 = vdwg.mxu0
    %2717 = vmatpush.bf16.msra.mxu0 %v1868
    %2718 = vmatpush.bf16.msra.mxu0 %v1866
    %2719 = vmatpush.bf16.msra.mxu0 %v1864
    %2720 = vmatpush.bf16.msra.mxu0 %v1862
    %2721 = vmatpush.bf16.msra.mxu0 %v1860
    %2722 = vmatpush.bf16.msra.mxu0 %v1858
    %2723 = vmatpush.bf16.msra.mxu0 %v1856
    %2724 = vmatpush.bf16.msra.mxu0 %v1854
    %2725 = vmatmul.bf16.gmra.mxu0 %v671
    %v2726 = vpop.f32.mrf.mxu0
    %v2727 = vadd.f32 %v2714, %v2726
    %v2728 = vpop.f32.mrf.mxu0
    %2729 = vdwg.mxu0
    %2730 = vmatpush.bf16.msra.mxu0 %v1884
    %2731 = vmatpush.bf16.msra.mxu0 %v1882
    %2732 = vmatpush.bf16.msra.mxu0 %v1880
    %2733 = vmatpush.bf16.msra.mxu0 %v1878
    %2734 = vmatpush.bf16.msra.mxu0 %v1876
    %2735 = vmatpush.bf16.msra.mxu0 %v1874
    %2736 = vmatpush.bf16.msra.mxu0 %v1872
    %2737 = vmatpush.bf16.msra.mxu0 %v1870
    %2738 = vmatmul.bf16.gmra.mxu0 %v672
    %v2739 = vpop.f32.mrf.mxu0
    %v2740 = vadd.f32 %v2727, %v2739
    %v2741 = vpop.f32.mrf.mxu0
    %2742 = vdwg.mxu0
    %2743 = vmatpush.bf16.msra.mxu0 %v1900
    %2744 = vmatpush.bf16.msra.mxu0 %v1898
    %2745 = vmatpush.bf16.msra.mxu0 %v1896
    %2746 = vmatpush.bf16.msra.mxu0 %v1894
    %2747 = vmatpush.bf16.msra.mxu0 %v1892
    %2748 = vmatpush.bf16.msra.mxu0 %v1890
    %2749 = vmatpush.bf16.msra.mxu0 %v1888
    %2750 = vmatpush.bf16.msra.mxu0 %v1886
    %2751 = vmatmul.bf16.gmra.mxu0 %v673
    %v2752 = vpop.f32.mrf.mxu0
    %v2753 = vadd.f32 %v2740, %v2752
    %v2754 = vpop.f32.mrf.mxu0
    %2755 = vdwg.mxu0
    %2756 = vmatpush.bf16.msra.mxu0 %v1916
    %2757 = vmatpush.bf16.msra.mxu0 %v1914
    %2758 = vmatpush.bf16.msra.mxu0 %v1912
    %2759 = vmatpush.bf16.msra.mxu0 %v1910
    %2760 = vmatpush.bf16.msra.mxu0 %v1908
    %2761 = vmatpush.bf16.msra.mxu0 %v1906
    %2762 = vmatpush.bf16.msra.mxu0 %v1904
    %2763 = vmatpush.bf16.msra.mxu0 %v1902
    %2764 = vmatmul.bf16.gmra.mxu0 %v674
    %v2765 = vpop.f32.mrf.mxu0
    %v2766 = vadd.f32 %v2753, %v2765
    %v2767 = vpop.f32.mrf.mxu0
    %2768 = vdwg.mxu0
    %2769 = vmatpush.bf16.msra.mxu0 %v1932
    %2770 = vmatpush.bf16.msra.mxu0 %v1930
    %2771 = vmatpush.bf16.msra.mxu0 %v1928
    %2772 = vmatpush.bf16.msra.mxu0 %v1926
    %2773 = vmatpush.bf16.msra.mxu0 %v1924
    %2774 = vmatpush.bf16.msra.mxu0 %v1922
    %2775 = vmatpush.bf16.msra.mxu0 %v1920
    %2776 = vmatpush.bf16.msra.mxu0 %v1918
    %2777 = vmatmul.bf16.gmra.mxu0 %v677
    %v2778 = vpop.f32.mrf.mxu0
    %v2779 = vadd.f32 %v2766, %v2778
    %v2780 = vpop.f32.mrf.mxu0
    %2781 = vdwg.mxu0
    %2782 = vmatpush.bf16.msra.mxu0 %v1948
    %2783 = vmatpush.bf16.msra.mxu0 %v1946
    %2784 = vmatpush.bf16.msra.mxu0 %v1944
    %2785 = vmatpush.bf16.msra.mxu0 %v1942
    %2786 = vmatpush.bf16.msra.mxu0 %v1940
    %2787 = vmatpush.bf16.msra.mxu0 %v1938
    %2788 = vmatpush.bf16.msra.mxu0 %v1936
    %2789 = vmatpush.bf16.msra.mxu0 %v1934
    %2790 = vmatmul.bf16.gmra.mxu0 %v678
    %v2791 = vpop.f32.mrf.mxu0
    %v2792 = vadd.f32 %v2779, %v2791
    %v2793 = vpop.f32.mrf.mxu0
    %2794 = vdwg.mxu0
    %2795 = vmatpush.bf16.msra.mxu0 %v1964
    %2796 = vmatpush.bf16.msra.mxu0 %v1962
    %2797 = vmatpush.bf16.msra.mxu0 %v1960
    %2798 = vmatpush.bf16.msra.mxu0 %v1958
    %2799 = vmatpush.bf16.msra.mxu0 %v1956
    %2800 = vmatpush.bf16.msra.mxu0 %v1954
    %2801 = vmatpush.bf16.msra.mxu0 %v1952
    %2802 = vmatpush.bf16.msra.mxu0 %v1950
    %2803 = vmatmul.bf16.gmra.mxu0 %v679
    %v2804 = vpop.f32.mrf.mxu0
    %v2805 = vadd.f32 %v2792, %v2804
    %v2806 = vpop.f32.mrf.mxu0
    %2807 = vdwg.mxu0
    %2808 = vmatpush.bf16.msra.mxu0 %v1980
    %2809 = vmatpush.bf16.msra.mxu0 %v1978
    %2810 = vmatpush.bf16.msra.mxu0 %v1976
    %2811 = vmatpush.bf16.msra.mxu0 %v1974
    %2812 = vmatpush.bf16.msra.mxu0 %v1972
    %2813 = vmatpush.bf16.msra.mxu0 %v1970
    %2814 = vmatpush.bf16.msra.mxu0 %v1968
    %2815 = vmatpush.bf16.msra.mxu0 %v1966
    %2816 = vmatmul.bf16.gmra.mxu0 %v680
    %v2817 = vpop.f32.mrf.mxu0
    %v2818 = vadd.f32 %v2805, %v2817
    %v2819 = vpop.f32.mrf.mxu0
    %2820 = vdwg.mxu0
    %v2821 = vmul.f32 %v645, 3.0
    %v2822 = vmul.f32 %v2821, %v645
    %v2824 = vperm.slane %v644, 0
    %v2825 = vperm.slane %v644, 4
    %v2828 = vperm.slane %v2824, 0
    %v2829 = vperm.slane %v2825, 0
    %v2830 = vmul.f32 %v2822, %v2828
    %v2831 = vmul.f32 %v2822, %v2829
    %v2832 = vsub.f32 %v2558, %v2830
    %v2833 = vsub.f32 %v2818, %v2831
    %v2834 = vmul.f32 %v126, 0.00390625
    %v2835 = vperm.slane %v643, 1
    %v2836 = vperm.slane %v643, 5
    %v2839 = vperm.slane %v2835, 1
    %v2840 = vperm.slane %v2836, 1
    %v2841 = vmul.f32 %v126, %v2839
    %v2842 = vmul.f32 %v126, %v2840
    %v2843 = vadd.f32 %v2832, %v2841
    %v2844 = vadd.f32 %v2833, %v2842
    %v2845 = vmul.f32 %v2834, 3.0
    %v2846 = vmul.f32 %v2845, %v2834
    %v2847 = vperm.slane %v644, 1
    %v2848 = vperm.slane %v644, 5
    %v2851 = vperm.slane %v2847, 1
    %v2852 = vperm.slane %v2848, 1
    %v2853 = vmul.f32 %v2846, %v2851
    %v2854 = vmul.f32 %v2846, %v2852
    %v2855 = vsub.f32 %v2843, %v2853
    %v2856 = vsub.f32 %v2844, %v2854
    %v2857 = vmul.f32 %v173, 0.00390625
    %v2858 = vperm.slane %v643, 2
    %v2859 = vperm.slane %v643, 6
    %v2862 = vperm.slane %v2858, 2
    %v2863 = vperm.slane %v2859, 2
    %v2864 = vmul.f32 %v173, %v2862
    %v2865 = vmul.f32 %v173, %v2863
    %v2866 = vadd.f32 %v2855, %v2864
    %v2867 = vadd.f32 %v2856, %v2865
    %v2868 = vmul.f32 %v2857, 3.0
    %v2869 = vmul.f32 %v2868, %v2857
    %v2870 = vperm.slane %v644, 2
    %v2871 = vperm.slane %v644, 6
    %v2874 = vperm.slane %v2870, 2
    %v2875 = vperm.slane %v2871, 2
    %v2876 = vmul.f32 %v2869, %v2874
    %v2877 = vmul.f32 %v2869, %v2875
    %v2878 = vsub.f32 %v2866, %v2876
    %v2879 = vsub.f32 %v2867, %v2877
    %v2880 = vmul.f32 %v220, 0.00390625
    %v2881 = vperm.slane %v643, 3
    %v2882 = vperm.slane %v643, 7
    %v2885 = vperm.slane %v2881, 3
    %v2886 = vperm.slane %v2882, 3
    %v2887 = vmul.f32 %v220, %v2885
    %v2888 = vmul.f32 %v220, %v2886
    %v2889 = vadd.f32 %v2878, %v2887
    %v2890 = vadd.f32 %v2879, %v2888
    %v2891 = vmul.f32 %v2880, 3.0
    %v2892 = vmul.f32 %v2891, %v2880
    %v2893 = vperm.slane %v644, 3
    %v2894 = vperm.slane %v644, 7
    %v2897 = vperm.slane %v2893, 3
    %v2898 = vperm.slane %v2894, 3
    %v2899 = vmul.f32 %v2892, %v2897
    %v2900 = vmul.f32 %v2892, %v2898
    %v2901 = vsub.f32 %v2889, %v2899
    %v2902 = vsub.f32 %v2890, %v2900
    %v2903 = vsel %vm31, %v2901, 0.0
    %vm2904 = vcmask 517120
    %v2905 = vsel %vm2904, %v2902, 0.0
    %v2906 = vadd.f32 %v2903, %v2905
    %2907 = vadd.xlane.f32.xlu0 %v2906
    %v2908 = vpop.xlane.xlu0 %2907
    %v2909 = vrcp.pop 192.0
    %v2910 = vmul.f32 192.0, %v2909
    %v2911 = vsub.f32 1.0, %v2910
    %v2912 = vmul.f32 %v2909, %v2911
    %v2913 = vadd.f32 %v2909, %v2912
    %vm2914 = vweird.f32 %v2909
    %v2915 = vsel %vm2914, %v2909, %v2913
    %v2916 = vmul.f32 %v2908, %v2915
    %v2917 = vsub.f32 %v2901, %v2916
    %v2918 = vsub.f32 %v2902, %v2916
    %v2919 = vmul.f32 %v2917, %v2917
    %v2920 = vmul.f32 %v2918, %v2918
    %v2921 = vsel %vm31, %v2919, 0.0
    %v2922 = vsel %vm2904, %v2920, 0.0
    %v2923 = vadd.f32 %v2921, %v2922
    %2924 = vadd.xlane.f32.xlu0 %v2923
    %v2925 = vpop.xlane.xlu0 %2924
    %v2926 = vmul.f32 %v2925, %v2915
    %v2927 = vadd.f32 %v2926, 1e-05
    %v2928 = vrsqrt.pop %v2927
    %v2929 = vmul.f32 %v2928, %v2927
    %v2930 = vmul.f32 %v2929, %v2928
    %v2931 = vmul.f32 0.5, %v2930
    %v2932 = vsub.f32 1.5, %v2931
    %v2933 = vmul.f32 %v2928, %v2932
    %vm2934 = vweird.f32 %v2927
    %vm2935 = vweird.f32 %v2928
    %vm2936 = vmor %vm2934, %vm2935
    %v2937 = vsel %vm2936, %v2928, %v2933
    %v2938 = vmul.f32 %v2917, %v2937
    %v2939 = vmul.f32 %v2918, %v2937
    %v2940 = vld [vmem:[%s4] sm:$0xff]
    %v2941 = vld [vmem:[%s4 + $0x8] sm:$0xff]
    %v2942 = vld [vmem:[%s4 + $0x10] sm:$0xff]
    %v2943 = vld [vmem:[%s4 + $0x18] sm:$0xff]
    %v2944 = vld [vmem:[%s4 + $0x20] sm:$0xff]
    %v2945 = vld [vmem:[%s4 + $0x28] sm:$0xff]
    %v2946 = vld [vmem:[%s4 + $0x30] sm:$0xff]
    %v2947 = vld [vmem:[%s4 + $0x38] sm:$0xff]
    %v2948 = vld [vmem:[%s4 + $0x40] sm:$0xff]
    %v2949 = vld [vmem:[%s4 + $0x48] sm:$0xff]
    %v2950 = vld [vmem:[%s4 + $0x50] sm:$0xff]
    %v2951 = vld [vmem:[%s4 + $0x58] sm:$0xff]
    %v2952 = vld [vmem:[%s4 + $0x60] sm:$0xff]
    %v2953 = vld [vmem:[%s4 + $0x68] sm:$0xff]
    %v2954 = vld [vmem:[%s4 + $0x70] sm:$0xff]
    %v2955 = vld [vmem:[%s4 + $0x78] sm:$0xff]
    %v2956 = vld [vmem:[%s4 + $0x80] sm:$0xff]
    %v2957 = vld [vmem:[%s4 + $0x88] sm:$0xff]
    %v2958 = vld [vmem:[%s4 + $0x90] sm:$0xff]
    %v2959 = vld [vmem:[%s4 + $0x98] sm:$0xff]
    %v2960 = vld [vmem:[%s4 + $0xa0] sm:$0xff]
    %v2961 = vld [vmem:[%s4 + $0xa8] sm:$0xff]
    %v2962 = vld [vmem:[%s4 + $0xb0] sm:$0xff]
    %v2963 = vld [vmem:[%s4 + $0xb8] sm:$0xff]
    %v2964 = vld [vmem:[%s5] sm:$0x1]
    %v2966 = vperm.slane %v2964, 0
    %vm2968 = vcmask 523264
    %v2970 = vsel %vm2968, %v2939, 0
    %2972 = vmatpush.msra.mxu0 %v2955
    %2973 = vmatpush.msra.mxu0 %v2954
    %2974 = vmatpush.msra.mxu0 %v2953
    %2975 = vmatpush.msra.mxu0 %v2952
    %2976 = vmatpush.msra.mxu0 %v2951
    %2977 = vmatpush.msra.mxu0 %v2950
    %2978 = vmatpush.msra.mxu0 %v2949
    %2979 = vmatpush.msra.mxu0 %v2948
    %2980 = vmatpush.msra.mxu0 %v2947
    %2981 = vmatpush.msra.mxu0 %v2946
    %2982 = vmatpush.msra.mxu0 %v2945
    %2983 = vmatpush.msra.mxu0 %v2944
    %2984 = vmatpush.msra.mxu0 %v2943
    %2985 = vmatpush.msra.mxu0 %v2942
    %2986 = vmatpush.msra.mxu0 %v2941
    %2987 = vmatpush.msra.mxu0 %v2940
    %2988 = vmatmul.f32.gmra.mxu0 %v2938
    %v2989 = vpop.f32.mrf.mxu0
    %v2990 = vadd.f32 %v2966, %v2989
    %2991 = vdwg.mxu0
    %2992 = vmatpush.msra.mxu0 0.0
    %2993 = vmatpush.msra.mxu0 0.0
    %2994 = vmatpush.msra.mxu0 0.0
    %2995 = vmatpush.msra.mxu0 0.0
    %2996 = vmatpush.msra.mxu0 0.0
    %2997 = vmatpush.msra.mxu0 0.0
    %2998 = vmatpush.msra.mxu0 0.0
    %2999 = vmatpush.msra.mxu0 0.0
    %3000 = vmatpush.msra.mxu0 %v2963
    %3001 = vmatpush.msra.mxu0 %v2962
    %3002 = vmatpush.msra.mxu0 %v2961
    %3003 = vmatpush.msra.mxu0 %v2960
    %3004 = vmatpush.msra.mxu0 %v2959
    %3005 = vmatpush.msra.mxu0 %v2958
    %3006 = vmatpush.msra.mxu0 %v2957
    %3007 = vmatpush.msra.mxu0 %v2956
    %3008 = vmatmul.f32.gmra.mxu0 %v2970
    %v3009 = vpop.f32.mrf.mxu0
    %v3010 = vadd.f32 %v2990, %v3009
    %3011 = vdwg.mxu0
    %v3012 = vmin.f32 %v3010, 20.0
    %v3013 = vmul.f32 %v3012, 1.442695
    %v3014 = vpow.pop %v3013
    %v3015 = vadd.f32 %v3014, 2.0
    %v3016 = vmul.f32 %v3014, %v3015
    %v3017 = vmul.f32 %v3010, %v3016
    %v3018 = vadd.f32 %v3016, 2.0
    %v3019 = vrcp.pop %v3018
    %v3020 = vmul.f32 %v3017, %v3019
    %3021 = vst [vmem:[#allocation4] sm:$0x3] %v3020
    // Predicated region
    $region26: #{homa_forward.1} parent=1 // pred_check
      _
    $region27: #{homa_forward.1} parent=1 // pred_check_branch
      %3023 = sbr.rel (0) target = $region29
    $region28: #{homa_forward.1} parent=1 // pred_region
      %3025 = vsyncadd [#allocation5], 0
      %s3027 = sshll.u32 [#allocation4], 4
      %s3028 = int_to_ptr.vmem [resolvable:$true] %s3027
      %s3029 = sshll.u32 %s6, 4
      %s3030 = int_to_ptr.hbm [resolvable:$true] %s3029
      %3032 = dma.vmem_to_hbm [thread:$0]  %s3028, 32, %s3030, [#allocation5]
    $region29: #{homa_forward.1} parent=1 // pred_fallthru
      _
    // Predicated region
    $region30: #{homa_forward.1} parent=1 // pred_check
      _
    $region31: #{homa_forward.1} parent=1 // pred_check_branch
      %3034 = sbr.rel (0) target = $region33
    $region32: #{homa_forward.1} parent=1 // pred_region
      %3036 = dma.done [#allocation5], 32
    $region33: #{homa_forward.1} parent=1 // pred_fallthru
      _
    %3037 = vsyncpa [#allocation5], 1

</llo_original>
